<compile_context>
chip_gen: v5e
topology: v5e:2x2
jax: 0.10.0
libtpu: 0.0.40
codegen_flags: <defaults>
</compile_context>

<pallas_src>
import jax
import jax.numpy as jnp
from jax.experimental import pallas as pl
from jax.experimental.pallas import tpu as pltpu

INPUT_SIZE = 19
HIDDEN = 64
SEQ = 4
NUM_LAYERS = 2
NUM_DIRS = 2
GATES = 4 * HIDDEN            # 256 per direction, gate order i|f|g|o
DHID = 2 * HIDDEN             # 128 = [fwd|bwd] hidden lanes
DGATES = 2 * GATES            # 512 = fused-direction gate lanes
L0_IN_PAD = 24                # lidar feature dim 19 padded to a sublane multiple
SMALL_PAD = 16                # small float features (7 or 10) padded to 16

# ---- LSTM weight-slab row offsets (lane width = DGATES = 512), all 8-aligned ----
R_WIH0 = 0                    # (24, 512)   layer-0 input proj (rows 19..23 zero)
R_WHH0 = R_WIH0 + L0_IN_PAD   # 24 : (128, 512) block-diag recurrent weights
R_B0 = R_WHH0 + DHID          # 152: bias row (padded to 8 rows)
R_WIH1 = R_B0 + 8             # 160: (128, 512)
R_WHH1 = R_WIH1 + DHID        # 288: (128, 512)
R_B1 = R_WHH1 + DHID          # 416: bias row (padded to 8 rows)
LSTM_ROWS = R_B1 + 8          # 424

# ---- MLP weight-slab row offsets (lane width = 256), all 8-aligned ----
M_W0H = 0                     # (256, 256): torch W0 rows for the h features
M_W0S = M_W0H + 4 * HIDDEN    # 256: (16, 256): rows for speed/act1/act2[/act], zero-pad
M_B0 = M_W0S + SMALL_PAD      # 272: bias row
M_W1 = M_B0 + 8               # 280: (256, 256)
M_B1 = M_W1 + 256             # 536: bias row
M_W2 = M_B1 + 8               # 544: q_net only, (256,1) zero-padded to (256,256)
M_B2 = M_W2 + 256             # 800: q_net only, bias row


# ------------------------------------ fused Pallas kernel ------------------------------

def make_fused_kernel(q_net, batch):
    """kernel(lidar_ref, small_ref, lstm_ref, mlp_ref, out_ref); gridless, all VMEM."""

    def kernel(lidar_ref, small_ref, lstm_ref, mlp_ref, out_ref):
        f32 = jnp.float32
        lidar = lidar_ref[...]                        # (SEQ*B, 24), time-major, padded
        small = small_ref[...]                        # (B, 16) = [speed,act1,act2(,act)]

        wih0 = lstm_ref[R_WIH0:R_WIH0 + L0_IN_PAD, :]     # (24, 512)
        whh0 = lstm_ref[R_WHH0:R_WHH0 + DHID, :]          # (128, 512) block-diag
        b0 = lstm_ref[R_B0:R_B0 + 1, :]                   # (1, 512)
        wih1 = lstm_ref[R_WIH1:R_WIH1 + DHID, :]
        whh1 = lstm_ref[R_WHH1:R_WHH1 + DHID, :]
        b1 = lstm_ref[R_B1:R_B1 + 1, :]

        # fwd-direction lane masks (lanes with bit 64 clear are the forward sub-block)
        gate_lane = jax.lax.broadcasted_iota(jnp.int32, (batch, DGATES), 1)
        fwd_gate_mask = (gate_lane & HIDDEN) == 0         # (B, 512)
        h_lane = jax.lax.broadcasted_iota(jnp.int32, (batch, DHID), 1)
        fwd_h_mask = (h_lane & HIDDEN) == 0               # (B, 128)

        def run_layer(xp, whh, need_outputs):
            """Fused bidirectional recurrence.  xp: (SEQ*B, 512) hoisted x@Wih + b,
            time-major; fwd consumes time s, bwd consumes time SEQ-1-s."""
            h = jnp.zeros((batch, DHID), f32)
            c = jnp.zeros((batch, DHID), f32)
            steps = []
            for s in range(SEQ):
                xf = xp[s * batch:(s + 1) * batch, :]
                xb = xp[(SEQ - 1 - s) * batch:(SEQ - s) * batch, :]
                g = jnp.where(fwd_gate_mask, xf, xb) + jnp.dot(
                    h, whh, preferred_element_type=f32)
                i_g = jax.nn.sigmoid(g[:, 0 * DHID:1 * DHID])
                f_g = jax.nn.sigmoid(g[:, 1 * DHID:2 * DHID])
                c_g = jnp.tanh(g[:, 2 * DHID:3 * DHID])
                o_g = jax.nn.sigmoid(g[:, 3 * DHID:4 * DHID])
                c = f_g * c + i_g * c_g
                h = o_g * jnp.tanh(c)
                if need_outputs:
                    steps.append(h)
            return steps, h

        # ---- layer 0: one hoisted 512-wide input projection for both directions
        xp0 = jnp.dot(lidar, wih0, preferred_element_type=f32) + b0    # (SEQ*B, 512)
        steps0, h_l0 = run_layer(xp0, whh0, need_outputs=True)

        # ---- layer-1 input at time t = [fwd out(t) | bwd out(t)] via lane select
        x1 = jnp.concatenate(
            [jnp.where(fwd_h_mask, steps0[t], steps0[SEQ - 1 - t]) for t in range(SEQ)],
            axis=0)                                                    # (SEQ*B, 128)
        xp1 = jnp.dot(x1, wih1, preferred_element_type=f32) + b1
        _, h_l1 = run_layer(xp1, whh1, need_outputs=False)

        # ---- exact torch semantics: h_n (4, B, 64).reshape(-1, 256)
        # (mixes batch rows when B > 1; explicit per-row construction, cheap at small B)
        # TODO(synk): for large B replace with jnp.stack(hs,0).reshape(B, 256).
        hs = (h_l0[:, 0:HIDDEN], h_l0[:, HIDDEN:DHID],
              h_l1[:, 0:HIDDEN], h_l1[:, HIDDEN:DHID])
        rows = []
        for r in range(batch):
            blocks = []
            for j in range(4):
                d, b_idx = divmod(4 * r + j, batch)
                blocks.append(hs[d][b_idx:b_idx + 1, :])
            rows.append(jnp.concatenate(blocks, axis=-1))              # (1, 256)
        h_mixed = jnp.concatenate(rows, axis=0)                        # (B, 256)

        # ---- MLP layer 0, split: h part (K=256, lane-aligned) + small-feature part
        w0h = mlp_ref[M_W0H:M_W0H + 4 * HIDDEN, :]
        w0s = mlp_ref[M_W0S:M_W0S + SMALL_PAD, :]
        b0m = mlp_ref[M_B0:M_B0 + 1, :]
        z = (jnp.dot(h_mixed, w0h, preferred_element_type=f32)
             + jnp.dot(small, w0s, preferred_element_type=f32) + b0m)
        # TODO(synk): nn.Dropout1d(0.15) sits here in train mode; eval => identity.
        z = jnp.maximum(z, 0.0)

        w1 = mlp_ref[M_W1:M_W1 + 256, :]
        b1m = mlp_ref[M_B1:M_B1 + 1, :]
        z = jnp.dot(z, w1, preferred_element_type=f32) + b1m

        if q_net:
            z = jnp.maximum(z, 0.0)
            w2 = mlp_ref[M_W2:M_W2 + 256, :]       # (256,256), only lane 0 is real
            b2m = mlp_ref[M_B2:M_B2 + 1, :]
            z = jnp.dot(z, w2, preferred_element_type=f32) + b2m
            out_ref[...] = z[:, 0:1]
        else:
            out_ref[...] = z

    return kernel


# ------------------------------------ wrapper -------------------------------------------

def rnn_net_forward(packed, x, q_net):
    """Mirrors RNNNet.forward (eval mode) with one fused, gridless pallas_call."""
    if q_net:
        speed, lidar, act1, act2, act = x
    else:
        speed, lidar, act1, act2 = x
    lidar = lidar.reshape(-1, SEQ, INPUT_SIZE)
    B = lidar.shape[0]
    # time-major slab so the hoisted input projection is one contiguous matmul
    lidar_tm = jnp.transpose(lidar, (1, 0, 2)).reshape(SEQ * B, INPUT_SIZE)
    lidar_tm = jnp.pad(lidar_tm, ((0, 0), (0, L0_IN_PAD - INPUT_SIZE)))

    pieces = [speed, act1, act2] + ([act] if q_net else [])
    small = jnp.concatenate(pieces, axis=-1)
    small = jnp.pad(small, ((0, 0), (0, SMALL_PAD - small.shape[1])))

    lstm_slab = packed["lstm_slab"]
    mlp_slab = packed["mlp_slab"]
    out_dim = 1 if q_net else 256

    # advisory cost estimate so XLA can overlap this tiny latency-bound call
    flops = 2 * (SEQ * B * L0_IN_PAD * DGATES            # layer-0 input proj
                 + SEQ * B * DHID * DGATES               # layer-1 input proj
                 + NUM_LAYERS * SEQ * B * DHID * DGATES  # recurrences
                 + B * (256 * 256 + SMALL_PAD * 256 + 256 * 256
                        + (256 * 256 if q_net else 0)))  # MLP
    transcendentals = NUM_LAYERS * SEQ * B * 5 * DHID
    bytes_accessed = 4 * (lidar_tm.size + small.size + lstm_slab.size
                          + mlp_slab.size + B * out_dim)

    return pl.pallas_call(
        make_fused_kernel(q_net, B),
        out_shape=jax.ShapeDtypeStruct((B, out_dim), jnp.float32),
        in_specs=[pl.BlockSpec(memory_space=pltpu.MemorySpace.VMEM)] * 4,
        out_specs=pl.BlockSpec(memory_space=pltpu.MemorySpace.VMEM),
        compiler_params=pltpu.CompilerParams(vmem_limit_bytes=16 * 1024 * 1024),
        cost_estimate=pl.CostEstimate(flops=flops, transcendentals=transcendentals,
                                      bytes_accessed=bytes_accessed),
    )(lidar_tm, small, lstm_slab, mlp_slab)


# ------------------------------------ parameter packing ---------------------------------

def _interleave_gates(wf, wb):
    """(in,256)+(in,256) with gate blocks [i|f|g|o] -> (in,512) with per-gate [fwd|bwd]."""
    cols = []
    for g in range(4):
        cols.append(wf[:, g * HIDDEN:(g + 1) * HIDDEN])
        cols.append(wb[:, g * HIDDEN:(g + 1) * HIDDEN])
    return jnp.concatenate(cols, axis=-1)


def _blockdiag_whh(whh_f, whh_b):
    """(64,256)x2 -> (128,512) block-diagonal recurrent weight in the interleaved layout."""
    out = jnp.zeros((DHID, DGATES), jnp.float32)
    for g in range(4):
        out = out.at[0:HIDDEN, g * DHID:g * DHID + HIDDEN].set(
            whh_f[:, g * HIDDEN:(g + 1) * HIDDEN])
        out = out.at[HIDDEN:DHID, g * DHID + HIDDEN:(g + 1) * DHID].set(
            whh_b[:, g * HIDDEN:(g + 1) * HIDDEN])
    return out


def pack_params(params, q_net):
    """Pack logical params into the two contiguous weight slabs the kernel expects."""
    (wih0f, whh0f, b0f, wih0b, whh0b, b0b,
     wih1f, whh1f, b1f, wih1b, whh1b, b1b) = params["lstm"]

    wih0 = jnp.pad(_interleave_gates(wih0f, wih0b),
                   ((0, L0_IN_PAD - INPUT_SIZE), (0, 0)))            # (24, 512)
    whh0 = _blockdiag_whh(whh0f, whh0b)                              # (128, 512)
    b0 = jnp.pad(_interleave_gates(b0f, b0b), ((0, 7), (0, 0)))      # (8, 512)
    wih1 = _interleave_gates(wih1f, wih1b)                           # (128, 512)
    whh1 = _blockdiag_whh(whh1f, whh1b)
    b1 = jnp.pad(_interleave_gates(b1f, b1b), ((0, 7), (0, 0)))
    lstm_slab = jnp.concatenate([wih0, whh0, b0, wih1, whh1, b1], axis=0)
    assert lstm_slab.shape == (LSTM_ROWS, DGATES)

    # MLP layer 0 split: rows 1..256 of torch W0 act on h_mixed, the rest on small feats
    w0, b0m = params["mlp"][0]
    w0h = w0[1:1 + 4 * HIDDEN, :]                                    # (256, 256)
    w0s = jnp.concatenate([w0[0:1, :], w0[1 + 4 * HIDDEN:, :]], axis=0)
    w0s = jnp.pad(w0s, ((0, SMALL_PAD - w0s.shape[0]), (0, 0)))      # (16, 256)
    b0p = jnp.pad(b0m, ((0, 7), (0, 0)))
    w1, b1m = params["mlp"][1]
    b1p = jnp.pad(b1m, ((0, 7), (0, 0)))
    pieces = [w0h, w0s, b0p, w1, b1p]
    if q_net:
        w2, b2m = params["mlp"][2]                                   # (256,1), (1,1)
        pieces.append(jnp.pad(w2, ((0, 0), (0, 256 - w2.shape[1]))))
        pieces.append(jnp.pad(b2m, ((0, 7), (0, 256 - b2m.shape[1]))))
    mlp_slab = jnp.concatenate(pieces, axis=0)
    return {"lstm_slab": lstm_slab, "mlp_slab": mlp_slab}


# ------------------------------------ reference (pure jnp) ------------------------------

def rnn_net_reference(params, x, q_net):
    if q_net:
        speed, lidar, act1, act2, act = x
    else:
        speed, lidar, act1, act2 = x
    lidar = lidar.reshape(-1, SEQ, INPUT_SIZE)
    B = lidar.shape[0]
    (wih0f, whh0f, b0f, wih0b, whh0b, b0b,
     wih1f, whh1f, b1f, wih1b, whh1b, b1b) = params["lstm"]

    def cell(x_t, h, c, wih, whh, b):
        g = (jnp.dot(x_t, wih, preferred_element_type=jnp.float32)
             + jnp.dot(h, whh, preferred_element_type=jnp.float32) + b)
        i = jax.nn.sigmoid(g[:, :HIDDEN])
        f = jax.nn.sigmoid(g[:, HIDDEN:2 * HIDDEN])
        gg = jnp.tanh(g[:, 2 * HIDDEN:3 * HIDDEN])
        o = jax.nn.sigmoid(g[:, 3 * HIDDEN:])
        c = f * c + i * gg
        h = o * jnp.tanh(c)
        return h, c

    def run(seq, wih, whh, b, reverse):
        h = jnp.zeros((B, HIDDEN), jnp.float32)
        c = jnp.zeros((B, HIDDEN), jnp.float32)
        outs = [None] * SEQ
        order = range(SEQ - 1, -1, -1) if reverse else range(SEQ)
        for t in order:
            h, c = cell(seq[t], h, c, wih, whh, b)
            outs[t] = h
        return outs, h

    xs = [lidar[:, t, :] for t in range(SEQ)]
    outs_f, h0f = run(xs, wih0f, whh0f, b0f, False)
    outs_b, h0b = run(xs, wih0b, whh0b, b0b, True)
    ins1 = [jnp.concatenate([outs_f[t], outs_b[t]], -1) for t in range(SEQ)]
    _, h1f = run(ins1, wih1f, whh1f, b1f, False)
    _, h1b = run(ins1, wih1b, whh1b, b1b, True)

    hn = jnp.stack([h0f, h0b, h1f, h1b], axis=0)               # torch h_n (4, B, 64)
    h = hn.reshape(-1, NUM_DIRS * NUM_LAYERS * HIDDEN)
    if q_net:
        feat = jnp.concatenate((speed, h, act1, act2, act), axis=-1)
    else:
        feat = jnp.concatenate((speed, h, act1, act2), axis=-1)

    out = feat
    n = len(params["mlp"])
    for j, (w, b) in enumerate(params["mlp"]):
        out = jnp.dot(out, w, preferred_element_type=jnp.float32) + b
        if j < n - 1:
            out = jnp.maximum(out, 0.0)
    return out


# ------------------------------------ parameter init ------------------------------------

def init_params(key, q_net):
    """Logical params: per-direction stacked-gate LSTM weights (in,256)/(64,256)/(1,256)
    with gate order i|f|g|o (biases pre-summed), and unpadded MLP (in,out)/(1,out)."""
    keys = iter(jax.random.split(key, 32))

    def u(shape, bound):
        return jax.random.uniform(next(keys), shape, jnp.float32, -bound, bound)

    k = 1.0 / (HIDDEN ** 0.5)
    lstm = []
    for layer in range(NUM_LAYERS):
        in_size = INPUT_SIZE if layer == 0 else NUM_DIRS * HIDDEN
        for _direction in range(NUM_DIRS):
            wih = u((in_size, GATES), k)
            whh = u((HIDDEN, GATES), k)
            b = u((1, GATES), k) + u((1, GATES), k)              # b_ih + b_hh
            lstm += [wih, whh, b]

    float_features = 10 if q_net else 7
    mlp_in = NUM_DIRS * NUM_LAYERS * HIDDEN + float_features      # 263 or 266
    sizes = [mlp_in] + ([256, 256, 1] if q_net else [256, 256])
    mlp = []
    for j in range(len(sizes) - 1):
        bound = 1.0 / (sizes[j] ** 0.5)
        mlp.append((u((sizes[j], sizes[j + 1]), bound), u((1, sizes[j + 1]), bound)))
    return {"lstm": lstm, "mlp": mlp}


# ------------------------------------ main -----------------------------------------------

if __name__ == "__main__":
    B = 2
    key = jax.random.PRNGKey(0)
    k1, k2, k3, k4, k5 = jax.random.split(key, 5)
    speed = jax.random.normal(k1, (B, 1), jnp.float32)
    lidar = jax.random.normal(k2, (B, SEQ * INPUT_SIZE), jnp.float32)   # (2, 76)
    act1 = jax.random.normal(k3, (B, 3), jnp.float32)
    act2 = jax.random.normal(k4, (B, 3), jnp.float32)
    act = jax.random.normal(k5, (B, 3), jnp.float32)

    all_ok = True
    for q_net in (False, True):
        params = init_params(jax.random.PRNGKey(42 + int(q_net)), q_net)
        packed = pack_params(params, q_net)
        inputs = (speed, lidar, act1, act2, act) if q_net else (speed, lidar, act1, act2)
        out = jax.block_until_ready(rnn_net_forward(packed, inputs, q_net))
        ref = rnn_net_reference(params, inputs, q_net)
        expected_dim = 1 if q_net else 256
        assert out.shape == (B, expected_dim), (out.shape, expected_dim)
        if not bool(jnp.allclose(out, ref, atol=2e-4, rtol=2e-4)):
            all_ok = False

    if all_ok:
        print("KERNEL_OK")
</pallas_src>

<mosaic_0001>
module attributes {stable_mosaic.version = 11 : i64} {
  func.func @kernel(%arg0: memref<8x24xf32, #tpu.memory_space<vmem>>, %arg1: memref<2x16xf32, #tpu.memory_space<vmem>>, %arg2: memref<424x512xf32, #tpu.memory_space<vmem>>, %arg3: memref<544x256xf32, #tpu.memory_space<vmem>>, %arg4: memref<2x256xf32, #tpu.memory_space<vmem>>) attributes {dimension_semantics = [], scalar_prefetch = 0 : i64, scratch_operands = 0 : i64, tpu.core_type = #tpu.core_type<tc>} {
    %c0 = arith.constant 0 : index
    %c0_0 = arith.constant 0 : index
    %0 = vector.load %arg0[%c0, %c0_0] : memref<8x24xf32, #tpu.memory_space<vmem>>, vector<8x24xf32>
    %c0_1 = arith.constant 0 : index
    %c0_2 = arith.constant 0 : index
    %1 = vector.load %arg1[%c0_1, %c0_2] : memref<2x16xf32, #tpu.memory_space<vmem>>, vector<2x16xf32>
    %c0_3 = arith.constant 0 : index
    %c0_4 = arith.constant 0 : index
    %2 = vector.load %arg2[%c0_3, %c0_4] : memref<424x512xf32, #tpu.memory_space<vmem>>, vector<24x512xf32>
    %c24 = arith.constant 24 : index
    %c0_5 = arith.constant 0 : index
    %3 = vector.load %arg2[%c24, %c0_5] : memref<424x512xf32, #tpu.memory_space<vmem>>, vector<128x512xf32>
    %c152 = arith.constant 152 : index
    %c0_6 = arith.constant 0 : index
    %4 = vector.load %arg2[%c152, %c0_6] : memref<424x512xf32, #tpu.memory_space<vmem>>, vector<1x512xf32>
    %c160 = arith.constant 160 : index
    %c0_7 = arith.constant 0 : index
    %5 = vector.load %arg2[%c160, %c0_7] : memref<424x512xf32, #tpu.memory_space<vmem>>, vector<128x512xf32>
    %c288 = arith.constant 288 : index
    %c0_8 = arith.constant 0 : index
    %6 = vector.load %arg2[%c288, %c0_8] : memref<424x512xf32, #tpu.memory_space<vmem>>, vector<128x512xf32>
    %c416 = arith.constant 416 : index
    %c0_9 = arith.constant 0 : index
    %7 = vector.load %arg2[%c416, %c0_9] : memref<424x512xf32, #tpu.memory_space<vmem>>, vector<1x512xf32>
    %8 = tpu.iota {dimensions = array<i32: 1>} : vector<2x512xi32>
    %c64_i32 = arith.constant 64 : i32
    %9 = vector.broadcast %c64_i32 : i32 to vector<2x512xi32>
    %10 = arith.andi %8, %9 : vector<2x512xi32>
    %c0_i32 = arith.constant 0 : i32
    %11 = vector.broadcast %c0_i32 : i32 to vector<2x512xi32>
    %12 = arith.cmpi eq, %10, %11 : vector<2x512xi32>
    %13 = tpu.iota {dimensions = array<i32: 1>} : vector<2x128xi32>
    %c64_i32_10 = arith.constant 64 : i32
    %14 = vector.broadcast %c64_i32_10 : i32 to vector<2x128xi32>
    %15 = arith.andi %13, %14 : vector<2x128xi32>
    %c0_i32_11 = arith.constant 0 : i32
    %16 = vector.broadcast %c0_i32_11 : i32 to vector<2x128xi32>
    %17 = arith.cmpi eq, %15, %16 : vector<2x128xi32>
    %cst = arith.constant dense<0.000000e+00> : vector<8x512xf32>
    %18 = tpu.matmul %0, %2, %cst {dimension_numbers = #tpu.dot_dimension_numbers<[1], [0], [0], [1], [0, 0, 1, 1], [], []>} : vector<8x24xf32>, vector<24x512xf32>, vector<8x512xf32> -> vector<8x512xf32>
    %19 = vector.broadcast %4 : vector<1x512xf32> to vector<8x512xf32>
    %20 = arith.addf %18, %19 : vector<8x512xf32>
    %cst_12 = arith.constant 0.000000e+00 : f32
    %21 = vector.broadcast %cst_12 : f32 to vector<2x128xf32>
    %cst_13 = arith.constant 0.000000e+00 : f32
    %22 = vector.broadcast %cst_13 : f32 to vector<2x128xf32>
    %23 = vector.extract_strided_slice %20 {offsets = [0, 0], sizes = [2, 512], strides = [1, 1]} : vector<8x512xf32> to vector<2x512xf32>
    %24 = vector.extract_strided_slice %20 {offsets = [6, 0], sizes = [2, 512], strides = [1, 1]} : vector<8x512xf32> to vector<2x512xf32>
    %25 = arith.select %12, %23, %24 : vector<2x512xi1>, vector<2x512xf32>
    %cst_14 = arith.constant dense<0.000000e+00> : vector<2x512xf32>
    %26 = tpu.matmul %21, %3, %cst_14 {dimension_numbers = #tpu.dot_dimension_numbers<[1], [0], [0], [1], [0, 0, 1, 1], [], []>} : vector<2x128xf32>, vector<128x512xf32>, vector<2x512xf32> -> vector<2x512xf32>
    %27 = arith.addf %25, %26 : vector<2x512xf32>
    %28 = vector.extract_strided_slice %27 {offsets = [0, 0], sizes = [2, 128], strides = [1, 1]} : vector<2x512xf32> to vector<2x128xf32>
    %29 = arith.negf %28 : vector<2x128xf32>
    %30 = math.exp %29 : vector<2x128xf32>
    %cst_15 = arith.constant 1.000000e+00 : f32
    %31 = vector.broadcast %cst_15 : f32 to vector<2x128xf32>
    %32 = arith.addf %31, %30 : vector<2x128xf32>
    %33 = arith.divf %31, %32 : vector<2x128xf32>
    %34 = vector.extract_strided_slice %27 {offsets = [0, 128], sizes = [2, 128], strides = [1, 1]} : vector<2x512xf32> to vector<2x128xf32>
    %35 = arith.negf %34 : vector<2x128xf32>
    %36 = math.exp %35 : vector<2x128xf32>
    %cst_16 = arith.constant 1.000000e+00 : f32
    %37 = vector.broadcast %cst_16 : f32 to vector<2x128xf32>
    %38 = arith.addf %37, %36 : vector<2x128xf32>
    %39 = arith.divf %37, %38 : vector<2x128xf32>
    %40 = vector.extract_strided_slice %27 {offsets = [0, 256], sizes = [2, 128], strides = [1, 1]} : vector<2x512xf32> to vector<2x128xf32>
    %41 = math.tanh %40 : vector<2x128xf32>
    %42 = vector.extract_strided_slice %27 {offsets = [0, 384], sizes = [2, 128], strides = [1, 1]} : vector<2x512xf32> to vector<2x128xf32>
    %43 = arith.negf %42 : vector<2x128xf32>
    %44 = math.exp %43 : vector<2x128xf32>
    %cst_17 = arith.constant 1.000000e+00 : f32
    %45 = vector.broadcast %cst_17 : f32 to vector<2x128xf32>
    %46 = arith.addf %45, %44 : vector<2x128xf32>
    %47 = arith.divf %45, %46 : vector<2x128xf32>
    %48 = arith.mulf %39, %22 : vector<2x128xf32>
    %49 = arith.mulf %33, %41 : vector<2x128xf32>
    %50 = arith.addf %48, %49 : vector<2x128xf32>
    %51 = math.tanh %50 : vector<2x128xf32>
    %52 = arith.mulf %47, %51 : vector<2x128xf32>
    %53 = vector.extract_strided_slice %20 {offsets = [2, 0], sizes = [2, 512], strides = [1, 1]} : vector<8x512xf32> to vector<2x512xf32>
    %54 = vector.extract_strided_slice %20 {offsets = [4, 0], sizes = [2, 512], strides = [1, 1]} : vector<8x512xf32> to vector<2x512xf32>
    %55 = arith.select %12, %53, %54 : vector<2x512xi1>, vector<2x512xf32>
    %cst_18 = arith.constant dense<0.000000e+00> : vector<2x512xf32>
    %56 = tpu.matmul %52, %3, %cst_18 {dimension_numbers = #tpu.dot_dimension_numbers<[1], [0], [0], [1], [0, 0, 1, 1], [], []>} : vector<2x128xf32>, vector<128x512xf32>, vector<2x512xf32> -> vector<2x512xf32>
    %57 = arith.addf %55, %56 : vector<2x512xf32>
    %58 = vector.extract_strided_slice %57 {offsets = [0, 0], sizes = [2, 128], strides = [1, 1]} : vector<2x512xf32> to vector<2x128xf32>
    %59 = arith.negf %58 : vector<2x128xf32>
    %60 = math.exp %59 : vector<2x128xf32>
    %cst_19 = arith.constant 1.000000e+00 : f32
    %61 = vector.broadcast %cst_19 : f32 to vector<2x128xf32>
    %62 = arith.addf %61, %60 : vector<2x128xf32>
    %63 = arith.divf %61, %62 : vector<2x128xf32>
    %64 = vector.extract_strided_slice %57 {offsets = [0, 128], sizes = [2, 128], strides = [1, 1]} : vector<2x512xf32> to vector<2x128xf32>
    %65 = arith.negf %64 : vector<2x128xf32>
    %66 = math.exp %65 : vector<2x128xf32>
    %cst_20 = arith.constant 1.000000e+00 : f32
    %67 = vector.broadcast %cst_20 : f32 to vector<2x128xf32>
    %68 = arith.addf %67, %66 : vector<2x128xf32>
    %69 = arith.divf %67, %68 : vector<2x128xf32>
    %70 = vector.extract_strided_slice %57 {offsets = [0, 256], sizes = [2, 128], strides = [1, 1]} : vector<2x512xf32> to vector<2x128xf32>
    %71 = math.tanh %70 : vector<2x128xf32>
    %72 = vector.extract_strided_slice %57 {offsets = [0, 384], sizes = [2, 128], strides = [1, 1]} : vector<2x512xf32> to vector<2x128xf32>
    %73 = arith.negf %72 : vector<2x128xf32>
    %74 = math.exp %73 : vector<2x128xf32>
    %cst_21 = arith.constant 1.000000e+00 : f32
    %75 = vector.broadcast %cst_21 : f32 to vector<2x128xf32>
    %76 = arith.addf %75, %74 : vector<2x128xf32>
    %77 = arith.divf %75, %76 : vector<2x128xf32>
    %78 = arith.mulf %69, %50 : vector<2x128xf32>
    %79 = arith.mulf %63, %71 : vector<2x128xf32>
    %80 = arith.addf %78, %79 : vector<2x128xf32>
    %81 = math.tanh %80 : vector<2x128xf32>
    %82 = arith.mulf %77, %81 : vector<2x128xf32>
    %83 = vector.extract_strided_slice %20 {offsets = [4, 0], sizes = [2, 512], strides = [1, 1]} : vector<8x512xf32> to vector<2x512xf32>
    %84 = vector.extract_strided_slice %20 {offsets = [2, 0], sizes = [2, 512], strides = [1, 1]} : vector<8x512xf32> to vector<2x512xf32>
    %85 = arith.select %12, %83, %84 : vector<2x512xi1>, vector<2x512xf32>
    %cst_22 = arith.constant dense<0.000000e+00> : vector<2x512xf32>
    %86 = tpu.matmul %82, %3, %cst_22 {dimension_numbers = #tpu.dot_dimension_numbers<[1], [0], [0], [1], [0, 0, 1, 1], [], []>} : vector<2x128xf32>, vector<128x512xf32>, vector<2x512xf32> -> vector<2x512xf32>
    %87 = arith.addf %85, %86 : vector<2x512xf32>
    %88 = vector.extract_strided_slice %87 {offsets = [0, 0], sizes = [2, 128], strides = [1, 1]} : vector<2x512xf32> to vector<2x128xf32>
    %89 = arith.negf %88 : vector<2x128xf32>
    %90 = math.exp %89 : vector<2x128xf32>
    %cst_23 = arith.constant 1.000000e+00 : f32
    %91 = vector.broadcast %cst_23 : f32 to vector<2x128xf32>
    %92 = arith.addf %91, %90 : vector<2x128xf32>
    %93 = arith.divf %91, %92 : vector<2x128xf32>
    %94 = vector.extract_strided_slice %87 {offsets = [0, 128], sizes = [2, 128], strides = [1, 1]} : vector<2x512xf32> to vector<2x128xf32>
    %95 = arith.negf %94 : vector<2x128xf32>
    %96 = math.exp %95 : vector<2x128xf32>
    %cst_24 = arith.constant 1.000000e+00 : f32
    %97 = vector.broadcast %cst_24 : f32 to vector<2x128xf32>
    %98 = arith.addf %97, %96 : vector<2x128xf32>
    %99 = arith.divf %97, %98 : vector<2x128xf32>
    %100 = vector.extract_strided_slice %87 {offsets = [0, 256], sizes = [2, 128], strides = [1, 1]} : vector<2x512xf32> to vector<2x128xf32>
    %101 = math.tanh %100 : vector<2x128xf32>
    %102 = vector.extract_strided_slice %87 {offsets = [0, 384], sizes = [2, 128], strides = [1, 1]} : vector<2x512xf32> to vector<2x128xf32>
    %103 = arith.negf %102 : vector<2x128xf32>
    %104 = math.exp %103 : vector<2x128xf32>
    %cst_25 = arith.constant 1.000000e+00 : f32
    %105 = vector.broadcast %cst_25 : f32 to vector<2x128xf32>
    %106 = arith.addf %105, %104 : vector<2x128xf32>
    %107 = arith.divf %105, %106 : vector<2x128xf32>
    %108 = arith.mulf %99, %80 : vector<2x128xf32>
    %109 = arith.mulf %93, %101 : vector<2x128xf32>
    %110 = arith.addf %108, %109 : vector<2x128xf32>
    %111 = math.tanh %110 : vector<2x128xf32>
    %112 = arith.mulf %107, %111 : vector<2x128xf32>
    %113 = vector.extract_strided_slice %20 {offsets = [6, 0], sizes = [2, 512], strides = [1, 1]} : vector<8x512xf32> to vector<2x512xf32>
    %114 = vector.extract_strided_slice %20 {offsets = [0, 0], sizes = [2, 512], strides = [1, 1]} : vector<8x512xf32> to vector<2x512xf32>
    %115 = arith.select %12, %113, %114 : vector<2x512xi1>, vector<2x512xf32>
    %cst_26 = arith.constant dense<0.000000e+00> : vector<2x512xf32>
    %116 = tpu.matmul %112, %3, %cst_26 {dimension_numbers = #tpu.dot_dimension_numbers<[1], [0], [0], [1], [0, 0, 1, 1], [], []>} : vector<2x128xf32>, vector<128x512xf32>, vector<2x512xf32> -> vector<2x512xf32>
    %117 = arith.addf %115, %116 : vector<2x512xf32>
    %118 = vector.extract_strided_slice %117 {offsets = [0, 0], sizes = [2, 128], strides = [1, 1]} : vector<2x512xf32> to vector<2x128xf32>
    %119 = arith.negf %118 : vector<2x128xf32>
    %120 = math.exp %119 : vector<2x128xf32>
    %cst_27 = arith.constant 1.000000e+00 : f32
    %121 = vector.broadcast %cst_27 : f32 to vector<2x128xf32>
    %122 = arith.addf %121, %120 : vector<2x128xf32>
    %123 = arith.divf %121, %122 : vector<2x128xf32>
    %124 = vector.extract_strided_slice %117 {offsets = [0, 128], sizes = [2, 128], strides = [1, 1]} : vector<2x512xf32> to vector<2x128xf32>
    %125 = arith.negf %124 : vector<2x128xf32>
    %126 = math.exp %125 : vector<2x128xf32>
    %cst_28 = arith.constant 1.000000e+00 : f32
    %127 = vector.broadcast %cst_28 : f32 to vector<2x128xf32>
    %128 = arith.addf %127, %126 : vector<2x128xf32>
    %129 = arith.divf %127, %128 : vector<2x128xf32>
    %130 = vector.extract_strided_slice %117 {offsets = [0, 256], sizes = [2, 128], strides = [1, 1]} : vector<2x512xf32> to vector<2x128xf32>
    %131 = math.tanh %130 : vector<2x128xf32>
    %132 = vector.extract_strided_slice %117 {offsets = [0, 384], sizes = [2, 128], strides = [1, 1]} : vector<2x512xf32> to vector<2x128xf32>
    %133 = arith.negf %132 : vector<2x128xf32>
    %134 = math.exp %133 : vector<2x128xf32>
    %cst_29 = arith.constant 1.000000e+00 : f32
    %135 = vector.broadcast %cst_29 : f32 to vector<2x128xf32>
    %136 = arith.addf %135, %134 : vector<2x128xf32>
    %137 = arith.divf %135, %136 : vector<2x128xf32>
    %138 = arith.mulf %129, %110 : vector<2x128xf32>
    %139 = arith.mulf %123, %131 : vector<2x128xf32>
    %140 = arith.addf %138, %139 : vector<2x128xf32>
    %141 = math.tanh %140 : vector<2x128xf32>
    %142 = arith.mulf %137, %141 : vector<2x128xf32>
    %143 = arith.select %17, %52, %142 : vector<2x128xi1>, vector<2x128xf32>
    %144 = arith.select %17, %82, %112 : vector<2x128xi1>, vector<2x128xf32>
    %145 = arith.select %17, %112, %82 : vector<2x128xi1>, vector<2x128xf32>
    %146 = arith.select %17, %142, %52 : vector<2x128xi1>, vector<2x128xf32>
    %147 = tpu.concatenate %143, %144, %145, %146 in 0 : vector<2x128xf32>, vector<2x128xf32>, vector<2x128xf32>, vector<2x128xf32> -> vector<8x128xf32>
    %cst_30 = arith.constant dense<0.000000e+00> : vector<8x512xf32>
    %148 = tpu.matmul %147, %5, %cst_30 {dimension_numbers = #tpu.dot_dimension_numbers<[1], [0], [0], [1], [0, 0, 1, 1], [], []>} : vector<8x128xf32>, vector<128x512xf32>, vector<8x512xf32> -> vector<8x512xf32>
    %149 = vector.broadcast %7 : vector<1x512xf32> to vector<8x512xf32>
    %150 = arith.addf %148, %149 : vector<8x512xf32>
    %cst_31 = arith.constant 0.000000e+00 : f32
    %151 = vector.broadcast %cst_31 : f32 to vector<2x128xf32>
    %cst_32 = arith.constant 0.000000e+00 : f32
    %152 = vector.broadcast %cst_32 : f32 to vector<2x128xf32>
    %153 = vector.extract_strided_slice %150 {offsets = [0, 0], sizes = [2, 512], strides = [1, 1]} : vector<8x512xf32> to vector<2x512xf32>
    %154 = vector.extract_strided_slice %150 {offsets = [6, 0], sizes = [2, 512], strides = [1, 1]} : vector<8x512xf32> to vector<2x512xf32>
    %155 = arith.select %12, %153, %154 : vector<2x512xi1>, vector<2x512xf32>
    %cst_33 = arith.constant dense<0.000000e+00> : vector<2x512xf32>
    %156 = tpu.matmul %151, %6, %cst_33 {dimension_numbers = #tpu.dot_dimension_numbers<[1], [0], [0], [1], [0, 0, 1, 1], [], []>} : vector<2x128xf32>, vector<128x512xf32>, vector<2x512xf32> -> vector<2x512xf32>
    %157 = arith.addf %155, %156 : vector<2x512xf32>
    %158 = vector.extract_strided_slice %157 {offsets = [0, 0], sizes = [2, 128], strides = [1, 1]} : vector<2x512xf32> to vector<2x128xf32>
    %159 = arith.negf %158 : vector<2x128xf32>
    %160 = math.exp %159 : vector<2x128xf32>
    %cst_34 = arith.constant 1.000000e+00 : f32
    %161 = vector.broadcast %cst_34 : f32 to vector<2x128xf32>
    %162 = arith.addf %161, %160 : vector<2x128xf32>
    %163 = arith.divf %161, %162 : vector<2x128xf32>
    %164 = vector.extract_strided_slice %157 {offsets = [0, 128], sizes = [2, 128], strides = [1, 1]} : vector<2x512xf32> to vector<2x128xf32>
    %165 = arith.negf %164 : vector<2x128xf32>
    %166 = math.exp %165 : vector<2x128xf32>
    %cst_35 = arith.constant 1.000000e+00 : f32
    %167 = vector.broadcast %cst_35 : f32 to vector<2x128xf32>
    %168 = arith.addf %167, %166 : vector<2x128xf32>
    %169 = arith.divf %167, %168 : vector<2x128xf32>
    %170 = vector.extract_strided_slice %157 {offsets = [0, 256], sizes = [2, 128], strides = [1, 1]} : vector<2x512xf32> to vector<2x128xf32>
    %171 = math.tanh %170 : vector<2x128xf32>
    %172 = vector.extract_strided_slice %157 {offsets = [0, 384], sizes = [2, 128], strides = [1, 1]} : vector<2x512xf32> to vector<2x128xf32>
    %173 = arith.negf %172 : vector<2x128xf32>
    %174 = math.exp %173 : vector<2x128xf32>
    %cst_36 = arith.constant 1.000000e+00 : f32
    %175 = vector.broadcast %cst_36 : f32 to vector<2x128xf32>
    %176 = arith.addf %175, %174 : vector<2x128xf32>
    %177 = arith.divf %175, %176 : vector<2x128xf32>
    %178 = arith.mulf %169, %152 : vector<2x128xf32>
    %179 = arith.mulf %163, %171 : vector<2x128xf32>
    %180 = arith.addf %178, %179 : vector<2x128xf32>
    %181 = math.tanh %180 : vector<2x128xf32>
    %182 = arith.mulf %177, %181 : vector<2x128xf32>
    %183 = vector.extract_strided_slice %150 {offsets = [2, 0], sizes = [2, 512], strides = [1, 1]} : vector<8x512xf32> to vector<2x512xf32>
    %184 = vector.extract_strided_slice %150 {offsets = [4, 0], sizes = [2, 512], strides = [1, 1]} : vector<8x512xf32> to vector<2x512xf32>
    %185 = arith.select %12, %183, %184 : vector<2x512xi1>, vector<2x512xf32>
    %cst_37 = arith.constant dense<0.000000e+00> : vector<2x512xf32>
    %186 = tpu.matmul %182, %6, %cst_37 {dimension_numbers = #tpu.dot_dimension_numbers<[1], [0], [0], [1], [0, 0, 1, 1], [], []>} : vector<2x128xf32>, vector<128x512xf32>, vector<2x512xf32> -> vector<2x512xf32>
    %187 = arith.addf %185, %186 : vector<2x512xf32>
    %188 = vector.extract_strided_slice %187 {offsets = [0, 0], sizes = [2, 128], strides = [1, 1]} : vector<2x512xf32> to vector<2x128xf32>
    %189 = arith.negf %188 : vector<2x128xf32>
    %190 = math.exp %189 : vector<2x128xf32>
    %cst_38 = arith.constant 1.000000e+00 : f32
    %191 = vector.broadcast %cst_38 : f32 to vector<2x128xf32>
    %192 = arith.addf %191, %190 : vector<2x128xf32>
    %193 = arith.divf %191, %192 : vector<2x128xf32>
    %194 = vector.extract_strided_slice %187 {offsets = [0, 128], sizes = [2, 128], strides = [1, 1]} : vector<2x512xf32> to vector<2x128xf32>
    %195 = arith.negf %194 : vector<2x128xf32>
    %196 = math.exp %195 : vector<2x128xf32>
    %cst_39 = arith.constant 1.000000e+00 : f32
    %197 = vector.broadcast %cst_39 : f32 to vector<2x128xf32>
    %198 = arith.addf %197, %196 : vector<2x128xf32>
    %199 = arith.divf %197, %198 : vector<2x128xf32>
    %200 = vector.extract_strided_slice %187 {offsets = [0, 256], sizes = [2, 128], strides = [1, 1]} : vector<2x512xf32> to vector<2x128xf32>
    %201 = math.tanh %200 : vector<2x128xf32>
    %202 = vector.extract_strided_slice %187 {offsets = [0, 384], sizes = [2, 128], strides = [1, 1]} : vector<2x512xf32> to vector<2x128xf32>
    %203 = arith.negf %202 : vector<2x128xf32>
    %204 = math.exp %203 : vector<2x128xf32>
    %cst_40 = arith.constant 1.000000e+00 : f32
    %205 = vector.broadcast %cst_40 : f32 to vector<2x128xf32>
    %206 = arith.addf %205, %204 : vector<2x128xf32>
    %207 = arith.divf %205, %206 : vector<2x128xf32>
    %208 = arith.mulf %199, %180 : vector<2x128xf32>
    %209 = arith.mulf %193, %201 : vector<2x128xf32>
    %210 = arith.addf %208, %209 : vector<2x128xf32>
    %211 = math.tanh %210 : vector<2x128xf32>
    %212 = arith.mulf %207, %211 : vector<2x128xf32>
    %213 = vector.extract_strided_slice %150 {offsets = [4, 0], sizes = [2, 512], strides = [1, 1]} : vector<8x512xf32> to vector<2x512xf32>
    %214 = vector.extract_strided_slice %150 {offsets = [2, 0], sizes = [2, 512], strides = [1, 1]} : vector<8x512xf32> to vector<2x512xf32>
    %215 = arith.select %12, %213, %214 : vector<2x512xi1>, vector<2x512xf32>
    %cst_41 = arith.constant dense<0.000000e+00> : vector<2x512xf32>
    %216 = tpu.matmul %212, %6, %cst_41 {dimension_numbers = #tpu.dot_dimension_numbers<[1], [0], [0], [1], [0, 0, 1, 1], [], []>} : vector<2x128xf32>, vector<128x512xf32>, vector<2x512xf32> -> vector<2x512xf32>
    %217 = arith.addf %215, %216 : vector<2x512xf32>
    %218 = vector.extract_strided_slice %217 {offsets = [0, 0], sizes = [2, 128], strides = [1, 1]} : vector<2x512xf32> to vector<2x128xf32>
    %219 = arith.negf %218 : vector<2x128xf32>
    %220 = math.exp %219 : vector<2x128xf32>
    %cst_42 = arith.constant 1.000000e+00 : f32
    %221 = vector.broadcast %cst_42 : f32 to vector<2x128xf32>
    %222 = arith.addf %221, %220 : vector<2x128xf32>
    %223 = arith.divf %221, %222 : vector<2x128xf32>
    %224 = vector.extract_strided_slice %217 {offsets = [0, 128], sizes = [2, 128], strides = [1, 1]} : vector<2x512xf32> to vector<2x128xf32>
    %225 = arith.negf %224 : vector<2x128xf32>
    %226 = math.exp %225 : vector<2x128xf32>
    %cst_43 = arith.constant 1.000000e+00 : f32
    %227 = vector.broadcast %cst_43 : f32 to vector<2x128xf32>
    %228 = arith.addf %227, %226 : vector<2x128xf32>
    %229 = arith.divf %227, %228 : vector<2x128xf32>
    %230 = vector.extract_strided_slice %217 {offsets = [0, 256], sizes = [2, 128], strides = [1, 1]} : vector<2x512xf32> to vector<2x128xf32>
    %231 = math.tanh %230 : vector<2x128xf32>
    %232 = vector.extract_strided_slice %217 {offsets = [0, 384], sizes = [2, 128], strides = [1, 1]} : vector<2x512xf32> to vector<2x128xf32>
    %233 = arith.negf %232 : vector<2x128xf32>
    %234 = math.exp %233 : vector<2x128xf32>
    %cst_44 = arith.constant 1.000000e+00 : f32
    %235 = vector.broadcast %cst_44 : f32 to vector<2x128xf32>
    %236 = arith.addf %235, %234 : vector<2x128xf32>
    %237 = arith.divf %235, %236 : vector<2x128xf32>
    %238 = arith.mulf %229, %210 : vector<2x128xf32>
    %239 = arith.mulf %223, %231 : vector<2x128xf32>
    %240 = arith.addf %238, %239 : vector<2x128xf32>
    %241 = math.tanh %240 : vector<2x128xf32>
    %242 = arith.mulf %237, %241 : vector<2x128xf32>
    %243 = vector.extract_strided_slice %150 {offsets = [6, 0], sizes = [2, 512], strides = [1, 1]} : vector<8x512xf32> to vector<2x512xf32>
    %244 = vector.extract_strided_slice %150 {offsets = [0, 0], sizes = [2, 512], strides = [1, 1]} : vector<8x512xf32> to vector<2x512xf32>
    %245 = arith.select %12, %243, %244 : vector<2x512xi1>, vector<2x512xf32>
    %cst_45 = arith.constant dense<0.000000e+00> : vector<2x512xf32>
    %246 = tpu.matmul %242, %6, %cst_45 {dimension_numbers = #tpu.dot_dimension_numbers<[1], [0], [0], [1], [0, 0, 1, 1], [], []>} : vector<2x128xf32>, vector<128x512xf32>, vector<2x512xf32> -> vector<2x512xf32>
    %247 = arith.addf %245, %246 : vector<2x512xf32>
    %248 = vector.extract_strided_slice %247 {offsets = [0, 0], sizes = [2, 128], strides = [1, 1]} : vector<2x512xf32> to vector<2x128xf32>
    %249 = arith.negf %248 : vector<2x128xf32>
    %250 = math.exp %249 : vector<2x128xf32>
    %cst_46 = arith.constant 1.000000e+00 : f32
    %251 = vector.broadcast %cst_46 : f32 to vector<2x128xf32>
    %252 = arith.addf %251, %250 : vector<2x128xf32>
    %253 = arith.divf %251, %252 : vector<2x128xf32>
    %254 = vector.extract_strided_slice %247 {offsets = [0, 128], sizes = [2, 128], strides = [1, 1]} : vector<2x512xf32> to vector<2x128xf32>
    %255 = arith.negf %254 : vector<2x128xf32>
    %256 = math.exp %255 : vector<2x128xf32>
    %cst_47 = arith.constant 1.000000e+00 : f32
    %257 = vector.broadcast %cst_47 : f32 to vector<2x128xf32>
    %258 = arith.addf %257, %256 : vector<2x128xf32>
    %259 = arith.divf %257, %258 : vector<2x128xf32>
    %260 = vector.extract_strided_slice %247 {offsets = [0, 256], sizes = [2, 128], strides = [1, 1]} : vector<2x512xf32> to vector<2x128xf32>
    %261 = math.tanh %260 : vector<2x128xf32>
    %262 = vector.extract_strided_slice %247 {offsets = [0, 384], sizes = [2, 128], strides = [1, 1]} : vector<2x512xf32> to vector<2x128xf32>
    %263 = arith.negf %262 : vector<2x128xf32>
    %264 = math.exp %263 : vector<2x128xf32>
    %cst_48 = arith.constant 1.000000e+00 : f32
    %265 = vector.broadcast %cst_48 : f32 to vector<2x128xf32>
    %266 = arith.addf %265, %264 : vector<2x128xf32>
    %267 = arith.divf %265, %266 : vector<2x128xf32>
    %268 = arith.mulf %259, %240 : vector<2x128xf32>
    %269 = arith.mulf %253, %261 : vector<2x128xf32>
    %270 = arith.addf %268, %269 : vector<2x128xf32>
    %271 = math.tanh %270 : vector<2x128xf32>
    %272 = arith.mulf %267, %271 : vector<2x128xf32>
    %273 = vector.extract_strided_slice %142 {offsets = [0, 0], sizes = [2, 64], strides = [1, 1]} : vector<2x128xf32> to vector<2x64xf32>
    %274 = vector.extract_strided_slice %142 {offsets = [0, 64], sizes = [2, 64], strides = [1, 1]} : vector<2x128xf32> to vector<2x64xf32>
    %275 = vector.extract_strided_slice %272 {offsets = [0, 0], sizes = [2, 64], strides = [1, 1]} : vector<2x128xf32> to vector<2x64xf32>
    %276 = vector.extract_strided_slice %272 {offsets = [0, 64], sizes = [2, 64], strides = [1, 1]} : vector<2x128xf32> to vector<2x64xf32>
    %277 = vector.extract_strided_slice %273 {offsets = [0, 0], sizes = [1, 64], strides = [1, 1]} : vector<2x64xf32> to vector<1x64xf32>
    %278 = vector.extract_strided_slice %273 {offsets = [1, 0], sizes = [1, 64], strides = [1, 1]} : vector<2x64xf32> to vector<1x64xf32>
    %279 = vector.extract_strided_slice %274 {offsets = [0, 0], sizes = [1, 64], strides = [1, 1]} : vector<2x64xf32> to vector<1x64xf32>
    %280 = vector.extract_strided_slice %274 {offsets = [1, 0], sizes = [1, 64], strides = [1, 1]} : vector<2x64xf32> to vector<1x64xf32>
    %281 = tpu.concatenate %277, %278, %279, %280 in 1 : vector<1x64xf32>, vector<1x64xf32>, vector<1x64xf32>, vector<1x64xf32> -> vector<1x256xf32>
    %282 = vector.extract_strided_slice %275 {offsets = [0, 0], sizes = [1, 64], strides = [1, 1]} : vector<2x64xf32> to vector<1x64xf32>
    %283 = vector.extract_strided_slice %275 {offsets = [1, 0], sizes = [1, 64], strides = [1, 1]} : vector<2x64xf32> to vector<1x64xf32>
    %284 = vector.extract_strided_slice %276 {offsets = [0, 0], sizes = [1, 64], strides = [1, 1]} : vector<2x64xf32> to vector<1x64xf32>
    %285 = vector.extract_strided_slice %276 {offsets = [1, 0], sizes = [1, 64], strides = [1, 1]} : vector<2x64xf32> to vector<1x64xf32>
    %286 = tpu.concatenate %282, %283, %284, %285 in 1 : vector<1x64xf32>, vector<1x64xf32>, vector<1x64xf32>, vector<1x64xf32> -> vector<1x256xf32>
    %287 = tpu.concatenate %281, %286 in 0 : vector<1x256xf32>, vector<1x256xf32> -> vector<2x256xf32>
    %c0_49 = arith.constant 0 : index
    %c0_50 = arith.constant 0 : index
    %288 = vector.load %arg3[%c0_49, %c0_50] : memref<544x256xf32, #tpu.memory_space<vmem>>, vector<256x256xf32>
    %c256 = arith.constant 256 : index
    %c0_51 = arith.constant 0 : index
    %289 = vector.load %arg3[%c256, %c0_51] : memref<544x256xf32, #tpu.memory_space<vmem>>, vector<16x256xf32>
    %c272 = arith.constant 272 : index
    %c0_52 = arith.constant 0 : index
    %290 = vector.load %arg3[%c272, %c0_52] : memref<544x256xf32, #tpu.memory_space<vmem>>, vector<1x256xf32>
    %cst_53 = arith.constant dense<0.000000e+00> : vector<2x256xf32>
    %291 = tpu.matmul %287, %288, %cst_53 {dimension_numbers = #tpu.dot_dimension_numbers<[1], [0], [0], [1], [0, 0, 1, 1], [], []>} : vector<2x256xf32>, vector<256x256xf32>, vector<2x256xf32> -> vector<2x256xf32>
    %cst_54 = arith.constant dense<0.000000e+00> : vector<2x256xf32>
    %292 = tpu.matmul %1, %289, %cst_54 {dimension_numbers = #tpu.dot_dimension_numbers<[1], [0], [0], [1], [0, 0, 1, 1], [], []>} : vector<2x16xf32>, vector<16x256xf32>, vector<2x256xf32> -> vector<2x256xf32>
    %293 = arith.addf %291, %292 : vector<2x256xf32>
    %294 = vector.broadcast %290 : vector<1x256xf32> to vector<2x256xf32>
    %295 = arith.addf %293, %294 : vector<2x256xf32>
    %cst_55 = arith.constant 0.000000e+00 : f32
    %296 = vector.broadcast %cst_55 : f32 to vector<2x256xf32>
    %297 = arith.maximumf %295, %296 : vector<2x256xf32>
    %c280 = arith.constant 280 : index
    %c0_56 = arith.constant 0 : index
    %298 = vector.load %arg3[%c280, %c0_56] : memref<544x256xf32, #tpu.memory_space<vmem>>, vector<256x256xf32>
    %c536 = arith.constant 536 : index
    %c0_57 = arith.constant 0 : index
    %299 = vector.load %arg3[%c536, %c0_57] : memref<544x256xf32, #tpu.memory_space<vmem>>, vector<1x256xf32>
    %cst_58 = arith.constant dense<0.000000e+00> : vector<2x256xf32>
    %300 = tpu.matmul %297, %298, %cst_58 {dimension_numbers = #tpu.dot_dimension_numbers<[1], [0], [0], [1], [0, 0, 1, 1], [], []>} : vector<2x256xf32>, vector<256x256xf32>, vector<2x256xf32> -> vector<2x256xf32>
    %301 = vector.broadcast %299 : vector<1x256xf32> to vector<2x256xf32>
    %302 = arith.addf %300, %301 : vector<2x256xf32>
    %c0_59 = arith.constant 0 : index
    %c0_60 = arith.constant 0 : index
    %303 = vector.load %arg4[%c0_59, %c0_60] : memref<2x256xf32, #tpu.memory_space<vmem>>, vector<2x256xf32>
    tpu.vector_store %arg4[%c0_59, %c0_60], %302 {strides = array<i32>} : memref<2x256xf32, #tpu.memory_space<vmem>>, vector<2x256xf32>,
    return
  }
}

</mosaic_0001>

<llo_original>
// kernel: tpu_custom_call.1
$region0: #{tpu_custom_call.1}
  #allocation0 [shape = 'u32[]', space=smem, size = 0x4, offset = 0x4, fixed_abs, tag = 'smem constant byte address 0x4 - core index']
  #allocation1 [shape = 'u32[72,128]{1,0:T(1,128)}', space=vmem, size = 0x9000, scoped, tag = 'internal scratch']
  %s0 = inlined_call_operand.hbm [shape: f32[8,24], index: 0, kind: input, shape index: {}]
  %s1 = inlined_call_operand.hbm [shape: f32[2,16], index: 1, kind: input, shape index: {}]
  %s2 = inlined_call_operand.hbm [shape: f32[424,512], index: 2, kind: input, shape index: {}]
  %s3 = inlined_call_operand.hbm [shape: f32[544,256], index: 3, kind: input, shape index: {}]
  %s4 = inlined_call_operand.hbm [shape: f32[2,256], index: 4, kind: output, shape index: {}]
  %s5 = sld [smem:[#allocation0]]
  $region42: #{tpu_custom_call.1} parent=0
    _
  %s7 = ssub.s32 1, %s5
  %s8 = scalar_select 0, %s7, %s5
  $region1: #{tpu_custom_call.1} parent=0
    #allocation2 [shape = 'u8[4096]{0}', space=vmem, size = 0x1000, scoped, tag = 'input window, operand 0, single buffered']
    #allocation3 [shape = 's32[1]{0}', space=sflag, size = 0x4, scoped, tag = 'scoped memory for tpu_custom_call.1']
    #allocation4 [shape = 's32[1]{0}', space=sflag, size = 0x4, scoped, tag = 'scoped memory for tpu_custom_call.1']
    #allocation5 [shape = 'u8[1024]{0}', space=vmem, size = 0x400, scoped, tag = 'input window, operand 1, single buffered']
    #allocation6 [shape = 's32[1]{0}', space=sflag, size = 0x4, scoped, tag = 'scoped memory for tpu_custom_call.1']
    #allocation7 [shape = 'u8[868352]{0}', space=vmem, size = 0xd4000, scoped, tag = 'input window, operand 2, single buffered']
    #allocation8 [shape = 'u8[557056]{0}', space=vmem, size = 0x88000, scoped, tag = 'input window, operand 3, single buffered']
    #allocation9 [shape = 's32[1]{0}', space=sflag, size = 0x4, scoped, tag = 'scoped memory for tpu_custom_call.1']
    #allocation10 [shape = 'u8[2048]{0}', space=vmem, size = 0x800, scoped, tag = 'output window, operand 0, single buffered']
    %9 = vsyncpa [#allocation3], 0
    %10 = vsyncpa [#allocation6], 0
    %11 = vsyncpa [#allocation9], 0
    %12 = vsyncpa [#allocation4], 0
    // Predicated region
    $region2: #{tpu_custom_call.1} parent=1 // pred_check
      _
    $region3: #{tpu_custom_call.1} parent=1 // pred_check_branch
      %14 = sbr.rel (0) target = $region5
    $region4: #{tpu_custom_call.1} parent=1 // pred_region
      %16 = vsyncadd [#allocation3], 0
      %s18 = sshll.u32 %s0, 4
      %s19 = int_to_ptr.hbm [resolvable:$true] %s18
      %s20 = sshll.u32 [#allocation2], 4
      %s21 = int_to_ptr.vmem [resolvable:$true] %s20
      %23 = dma.hbm_to_vmem [thread:$0]  %s19, 128, %s21, [#allocation3]
    $region5: #{tpu_custom_call.1} parent=1 // pred_fallthru
      _
    // Predicated region
    $region6: #{tpu_custom_call.1} parent=1 // pred_check
      _
    $region7: #{tpu_custom_call.1} parent=1 // pred_check_branch
      %25 = sbr.rel (0) target = $region9
    $region8: #{tpu_custom_call.1} parent=1 // pred_region
      %27 = vsyncadd [#allocation6], 0
      %s29 = sshll.u32 %s1, 4
      %s30 = int_to_ptr.hbm [resolvable:$true] %s29
      %s31 = sshll.u32 [#allocation5], 4
      %s32 = int_to_ptr.vmem [resolvable:$true] %s31
      %34 = dma.hbm_to_vmem [thread:$0]  %s30, 32, %s32, [#allocation6]
    $region9: #{tpu_custom_call.1} parent=1 // pred_fallthru
      _
    // Predicated region
    $region10: #{tpu_custom_call.1} parent=1 // pred_check
      _
    $region11: #{tpu_custom_call.1} parent=1 // pred_check_branch
      %36 = sbr.rel (0) target = $region13
    $region12: #{tpu_custom_call.1} parent=1 // pred_region
      %38 = vsyncadd [#allocation6], 0
      %s39 = sshll.u32 %s2, 4
      %s40 = int_to_ptr.hbm [resolvable:$true] %s39
      %s41 = sshll.u32 [#allocation7], 4
      %s42 = int_to_ptr.vmem [resolvable:$true] %s41
      %47 = dma.hbm_to_vmem [thread:$0]  %s40, 27136, %s42, [#allocation6], 512, 512, 32
    $region13: #{tpu_custom_call.1} parent=1 // pred_fallthru
      _
    // Predicated region
    $region14: #{tpu_custom_call.1} parent=1 // pred_check
      _
    $region15: #{tpu_custom_call.1} parent=1 // pred_check_branch
      %49 = sbr.rel (0) target = $region17
    $region16: #{tpu_custom_call.1} parent=1 // pred_region
      %51 = vsyncadd [#allocation9], 0
      %s52 = sshll.u32 %s3, 4
      %s53 = int_to_ptr.hbm [resolvable:$true] %s52
      %s54 = sshll.u32 [#allocation8], 4
      %s55 = int_to_ptr.vmem [resolvable:$true] %s54
      %60 = dma.hbm_to_vmem [thread:$0]  %s53, 17408, %s55, [#allocation9], 256, 256, 16
    $region17: #{tpu_custom_call.1} parent=1 // pred_fallthru
      _
    // Predicated region
    $region18: #{tpu_custom_call.1} parent=1 // pred_check
      _
    $region19: #{tpu_custom_call.1} parent=1 // pred_check_branch
      %62 = sbr.rel (0) target = $region21
    $region20: #{tpu_custom_call.1} parent=1 // pred_region
      %64 = dma.done [#allocation3], 128
    $region21: #{tpu_custom_call.1} parent=1 // pred_fallthru
      _
    // Predicated region
    $region22: #{tpu_custom_call.1} parent=1 // pred_check
      _
    $region23: #{tpu_custom_call.1} parent=1 // pred_check_branch
      %66 = sbr.rel (0) target = $region25
    $region24: #{tpu_custom_call.1} parent=1 // pred_region
      %68 = dma.done [#allocation6], 32
    $region25: #{tpu_custom_call.1} parent=1 // pred_fallthru
      _
    // Predicated region
    $region26: #{tpu_custom_call.1} parent=1 // pred_check
      _
    $region27: #{tpu_custom_call.1} parent=1 // pred_check_branch
      %70 = sbr.rel (0) target = $region29
    $region28: #{tpu_custom_call.1} parent=1 // pred_region
      %72 = dma.done [#allocation6], 27136
    $region29: #{tpu_custom_call.1} parent=1 // pred_fallthru
      _
    // Predicated region
    $region30: #{tpu_custom_call.1} parent=1 // pred_check
      _
    $region31: #{tpu_custom_call.1} parent=1 // pred_check_branch
      %74 = sbr.rel (0) target = $region33
    $region32: #{tpu_custom_call.1} parent=1 // pred_region
      %76 = dma.done [#allocation9], 17408
    $region33: #{tpu_custom_call.1} parent=1 // pred_fallthru
      _
    %v77 = vld [vmem:[#allocation2] sm:$0xff]
    %v78 = vld [vmem:[#allocation5] sm:$0x3]
    %v79 = vld [vmem:[#allocation7] sm:$0xff]
    %v80 = vld [vmem:[#allocation7 + $0x8] sm:$0xff]
    %v81 = vld [vmem:[#allocation7 + $0x10] sm:$0xff]
    %v82 = vld [vmem:[#allocation7 + $0x18] sm:$0xff]
    %v83 = vld [vmem:[#allocation7 + $0x20] sm:$0xff]
    %v84 = vld [vmem:[#allocation7 + $0x28] sm:$0xff]
    %v85 = vld [vmem:[#allocation7 + $0x30] sm:$0xff]
    %v86 = vld [vmem:[#allocation7 + $0x38] sm:$0xff]
    %v87 = vld [vmem:[#allocation7 + $0x40] sm:$0xff]
    %v88 = vld [vmem:[#allocation7 + $0x48] sm:$0xff]
    %v89 = vld [vmem:[#allocation7 + $0x50] sm:$0xff]
    %v90 = vld [vmem:[#allocation7 + $0x58] sm:$0xff]
    %v91 = vld [vmem:[#allocation7 + $0x60] sm:$0xff]
    %v92 = vld [vmem:[#allocation7 + $0x68] sm:$0xff]
    %v93 = vld [vmem:[#allocation7 + $0x70] sm:$0xff]
    %v94 = vld [vmem:[#allocation7 + $0x78] sm:$0xff]
    %v95 = vld [vmem:[#allocation7 + $0x80] sm:$0xff]
    %v96 = vld [vmem:[#allocation7 + $0x88] sm:$0xff]
    %v97 = vld [vmem:[#allocation7 + $0x90] sm:$0xff]
    %v98 = vld [vmem:[#allocation7 + $0x98] sm:$0xff]
    %v99 = vld [vmem:[#allocation7 + $0xa0] sm:$0xff]
    %v100 = vld [vmem:[#allocation7 + $0xa8] sm:$0xff]
    %v101 = vld [vmem:[#allocation7 + $0xb0] sm:$0xff]
    %v102 = vld [vmem:[#allocation7 + $0xb8] sm:$0xff]
    %v103 = vld [vmem:[#allocation7 + $0xc0] sm:$0xff]
    %v104 = vld [vmem:[#allocation7 + $0xc8] sm:$0xff]
    %v105 = vld [vmem:[#allocation7 + $0xd0] sm:$0xff]
    %v106 = vld [vmem:[#allocation7 + $0xd8] sm:$0xff]
    %v107 = vld [vmem:[#allocation7 + $0xe0] sm:$0xff]
    %v108 = vld [vmem:[#allocation7 + $0xe8] sm:$0xff]
    %v109 = vld [vmem:[#allocation7 + $0xf0] sm:$0xff]
    %v110 = vld [vmem:[#allocation7 + $0xf8] sm:$0xff]
    %v111 = vld [vmem:[#allocation7 + $0x100] sm:$0xff]
    %v112 = vld [vmem:[#allocation7 + $0x108] sm:$0xff]
    %v113 = vld [vmem:[#allocation7 + $0x110] sm:$0xff]
    %v114 = vld [vmem:[#allocation7 + $0x118] sm:$0xff]
    %v115 = vld [vmem:[#allocation7 + $0x120] sm:$0xff]
    %v116 = vld [vmem:[#allocation7 + $0x128] sm:$0xff]
    %v117 = vld [vmem:[#allocation7 + $0x130] sm:$0xff]
    %v118 = vld [vmem:[#allocation7 + $0x138] sm:$0xff]
    %v119 = vld [vmem:[#allocation7 + $0x140] sm:$0xff]
    %v120 = vld [vmem:[#allocation7 + $0x148] sm:$0xff]
    %v121 = vld [vmem:[#allocation7 + $0x150] sm:$0xff]
    %v122 = vld [vmem:[#allocation7 + $0x158] sm:$0xff]
    %v123 = vld [vmem:[#allocation7 + $0x160] sm:$0xff]
    %v124 = vld [vmem:[#allocation7 + $0x168] sm:$0xff]
    %v125 = vld [vmem:[#allocation7 + $0x170] sm:$0xff]
    %v126 = vld [vmem:[#allocation7 + $0x178] sm:$0xff]
    %v127 = vld [vmem:[#allocation7 + $0x180] sm:$0xff]
    %v128 = vld [vmem:[#allocation7 + $0x188] sm:$0xff]
    %v129 = vld [vmem:[#allocation7 + $0x190] sm:$0xff]
    %v130 = vld [vmem:[#allocation7 + $0x198] sm:$0xff]
    %v131 = vld [vmem:[#allocation7 + $0x1a0] sm:$0xff]
    %v132 = vld [vmem:[#allocation7 + $0x1a8] sm:$0xff]
    %v133 = vld [vmem:[#allocation7 + $0x1b0] sm:$0xff]
    %v134 = vld [vmem:[#allocation7 + $0x1b8] sm:$0xff]
    %v135 = vld [vmem:[#allocation7 + $0x1c0] sm:$0xff]
    %v136 = vld [vmem:[#allocation7 + $0x1c8] sm:$0xff]
    %v137 = vld [vmem:[#allocation7 + $0x1d0] sm:$0xff]
    %v138 = vld [vmem:[#allocation7 + $0x1d8] sm:$0xff]
    %v139 = vld [vmem:[#allocation7 + $0x1e0] sm:$0xff]
    %v140 = vld [vmem:[#allocation7 + $0x1e8] sm:$0xff]
    %v141 = vld [vmem:[#allocation7 + $0x1f0] sm:$0xff]
    %v142 = vld [vmem:[#allocation7 + $0x1f8] sm:$0xff]
    %v143 = vld [vmem:[#allocation7 + $0x200] sm:$0xff]
    %v144 = vld [vmem:[#allocation7 + $0x208] sm:$0xff]
    %v145 = vld [vmem:[#allocation7 + $0x210] sm:$0xff]
    %v146 = vld [vmem:[#allocation7 + $0x218] sm:$0xff]
    %v147 = vld [vmem:[#allocation7 + $0x220] sm:$0xff]
    %v148 = vld [vmem:[#allocation7 + $0x228] sm:$0xff]
    %v149 = vld [vmem:[#allocation7 + $0x230] sm:$0xff]
    %v150 = vld [vmem:[#allocation7 + $0x238] sm:$0xff]
    %v151 = vld [vmem:[#allocation7 + $0x240] sm:$0xff]
    %v152 = vld [vmem:[#allocation7 + $0x248] sm:$0xff]
    %v153 = vld [vmem:[#allocation7 + $0x250] sm:$0xff]
    %v154 = vld [vmem:[#allocation7 + $0x258] sm:$0xff]
    %s155 = scalar_lea.vmem [#allocation7], 608
    %v156 = vld [vmem:[%s155] ss:$8 sm:$0xf]
    %v157 = vld [vmem:[#allocation7 + $0x280] sm:$0xff]
    %v158 = vld [vmem:[#allocation7 + $0x288] sm:$0xff]
    %v159 = vld [vmem:[#allocation7 + $0x290] sm:$0xff]
    %v160 = vld [vmem:[#allocation7 + $0x298] sm:$0xff]
    %v161 = vld [vmem:[#allocation7 + $0x2a0] sm:$0xff]
    %v162 = vld [vmem:[#allocation7 + $0x2a8] sm:$0xff]
    %v163 = vld [vmem:[#allocation7 + $0x2b0] sm:$0xff]
    %v164 = vld [vmem:[#allocation7 + $0x2b8] sm:$0xff]
    %v165 = vld [vmem:[#allocation7 + $0x2c0] sm:$0xff]
    %v166 = vld [vmem:[#allocation7 + $0x2c8] sm:$0xff]
    %v167 = vld [vmem:[#allocation7 + $0x2d0] sm:$0xff]
    %v168 = vld [vmem:[#allocation7 + $0x2d8] sm:$0xff]
    %v169 = vld [vmem:[#allocation7 + $0x2e0] sm:$0xff]
    %v170 = vld [vmem:[#allocation7 + $0x2e8] sm:$0xff]
    %v171 = vld [vmem:[#allocation7 + $0x2f0] sm:$0xff]
    %v172 = vld [vmem:[#allocation7 + $0x2f8] sm:$0xff]
    %v173 = vld [vmem:[#allocation7 + $0x300] sm:$0xff]
    %v174 = vld [vmem:[#allocation7 + $0x308] sm:$0xff]
    %v175 = vld [vmem:[#allocation7 + $0x310] sm:$0xff]
    %v176 = vld [vmem:[#allocation7 + $0x318] sm:$0xff]
    %v177 = vld [vmem:[#allocation7 + $0x320] sm:$0xff]
    %v178 = vld [vmem:[#allocation7 + $0x328] sm:$0xff]
    %v179 = vld [vmem:[#allocation7 + $0x330] sm:$0xff]
    %v180 = vld [vmem:[#allocation7 + $0x338] sm:$0xff]
    %v181 = vld [vmem:[#allocation7 + $0x340] sm:$0xff]
    %v182 = vld [vmem:[#allocation7 + $0x348] sm:$0xff]
    %v183 = vld [vmem:[#allocation7 + $0x350] sm:$0xff]
    %v184 = vld [vmem:[#allocation7 + $0x358] sm:$0xff]
    %v185 = vld [vmem:[#allocation7 + $0x360] sm:$0xff]
    %v186 = vld [vmem:[#allocation7 + $0x368] sm:$0xff]
    %v187 = vld [vmem:[#allocation7 + $0x370] sm:$0xff]
    %v188 = vld [vmem:[#allocation7 + $0x378] sm:$0xff]
    %v189 = vld [vmem:[#allocation7 + $0x380] sm:$0xff]
    %v190 = vld [vmem:[#allocation7 + $0x388] sm:$0xff]
    %v191 = vld [vmem:[#allocation7 + $0x390] sm:$0xff]
    %v192 = vld [vmem:[#allocation7 + $0x398] sm:$0xff]
    %v193 = vld [vmem:[#allocation7 + $0x3a0] sm:$0xff]
    %v194 = vld [vmem:[#allocation7 + $0x3a8] sm:$0xff]
    %v195 = vld [vmem:[#allocation7 + $0x3b0] sm:$0xff]
    %v196 = vld [vmem:[#allocation7 + $0x3b8] sm:$0xff]
    %v197 = vld [vmem:[#allocation7 + $0x3c0] sm:$0xff]
    %v198 = vld [vmem:[#allocation7 + $0x3c8] sm:$0xff]
    %v199 = vld [vmem:[#allocation7 + $0x3d0] sm:$0xff]
    %v200 = vld [vmem:[#allocation7 + $0x3d8] sm:$0xff]
    %v201 = vld [vmem:[#allocation7 + $0x3e0] sm:$0xff]
    %v202 = vld [vmem:[#allocation7 + $0x3e8] sm:$0xff]
    %v203 = vld [vmem:[#allocation7 + $0x3f0] sm:$0xff]
    %v204 = vld [vmem:[#allocation7 + $0x3f8] sm:$0xff]
    %v205 = vld [vmem:[#allocation7 + $0x400] sm:$0xff]
    %v206 = vld [vmem:[#allocation7 + $0x408] sm:$0xff]
    %v207 = vld [vmem:[#allocation7 + $0x410] sm:$0xff]
    %v208 = vld [vmem:[#allocation7 + $0x418] sm:$0xff]
    %v209 = vld [vmem:[#allocation7 + $0x420] sm:$0xff]
    %v210 = vld [vmem:[#allocation7 + $0x428] sm:$0xff]
    %v211 = vld [vmem:[#allocation7 + $0x430] sm:$0xff]
    %v212 = vld [vmem:[#allocation7 + $0x438] sm:$0xff]
    %v213 = vld [vmem:[#allocation7 + $0x440] sm:$0xff]
    %v214 = vld [vmem:[#allocation7 + $0x448] sm:$0xff]
    %v215 = vld [vmem:[#allocation7 + $0x450] sm:$0xff]
    %v216 = vld [vmem:[#allocation7 + $0x458] sm:$0xff]
    %v217 = vld [vmem:[#allocation7 + $0x460] sm:$0xff]
    %v218 = vld [vmem:[#allocation7 + $0x468] sm:$0xff]
    %v219 = vld [vmem:[#allocation7 + $0x470] sm:$0xff]
    %v220 = vld [vmem:[#allocation7 + $0x478] sm:$0xff]
    %v221 = vld [vmem:[#allocation7 + $0x480] sm:$0xff]
    %v222 = vld [vmem:[#allocation7 + $0x488] sm:$0xff]
    %v223 = vld [vmem:[#allocation7 + $0x490] sm:$0xff]
    %v224 = vld [vmem:[#allocation7 + $0x498] sm:$0xff]
    %v225 = vld [vmem:[#allocation7 + $0x4a0] sm:$0xff]
    %v226 = vld [vmem:[#allocation7 + $0x4a8] sm:$0xff]
    %v227 = vld [vmem:[#allocation7 + $0x4b0] sm:$0xff]
    %v228 = vld [vmem:[#allocation7 + $0x4b8] sm:$0xff]
    %v229 = vld [vmem:[#allocation7 + $0x4c0] sm:$0xff]
    %v230 = vld [vmem:[#allocation7 + $0x4c8] sm:$0xff]
    %v231 = vld [vmem:[#allocation7 + $0x4d0] sm:$0xff]
    %v232 = vld [vmem:[#allocation7 + $0x4d8] sm:$0xff]
    %v233 = vld [vmem:[#allocation7 + $0x4e0] sm:$0xff]
    %v234 = vld [vmem:[#allocation7 + $0x4e8] sm:$0xff]
    %v235 = vld [vmem:[#allocation7 + $0x4f0] sm:$0xff]
    %v236 = vld [vmem:[#allocation7 + $0x4f8] sm:$0xff]
    %v237 = vld [vmem:[#allocation7 + $0x500] sm:$0xff]
    %v238 = vld [vmem:[#allocation7 + $0x508] sm:$0xff]
    %v239 = vld [vmem:[#allocation7 + $0x510] sm:$0xff]
    %v240 = vld [vmem:[#allocation7 + $0x518] sm:$0xff]
    %v241 = vld [vmem:[#allocation7 + $0x520] sm:$0xff]
    %v242 = vld [vmem:[#allocation7 + $0x528] sm:$0xff]
    %v243 = vld [vmem:[#allocation7 + $0x530] sm:$0xff]
    %v244 = vld [vmem:[#allocation7 + $0x538] sm:$0xff]
    %v245 = vld [vmem:[#allocation7 + $0x540] sm:$0xff]
    %v246 = vld [vmem:[#allocation7 + $0x548] sm:$0xff]
    %v247 = vld [vmem:[#allocation7 + $0x550] sm:$0xff]
    %v248 = vld [vmem:[#allocation7 + $0x558] sm:$0xff]
    %v249 = vld [vmem:[#allocation7 + $0x560] sm:$0xff]
    %v250 = vld [vmem:[#allocation7 + $0x568] sm:$0xff]
    %v251 = vld [vmem:[#allocation7 + $0x570] sm:$0xff]
    %v252 = vld [vmem:[#allocation7 + $0x578] sm:$0xff]
    %v253 = vld [vmem:[#allocation7 + $0x580] sm:$0xff]
    %v254 = vld [vmem:[#allocation7 + $0x588] sm:$0xff]
    %v255 = vld [vmem:[#allocation7 + $0x590] sm:$0xff]
    %v256 = vld [vmem:[#allocation7 + $0x598] sm:$0xff]
    %v257 = vld [vmem:[#allocation7 + $0x5a0] sm:$0xff]
    %v258 = vld [vmem:[#allocation7 + $0x5a8] sm:$0xff]
    %v259 = vld [vmem:[#allocation7 + $0x5b0] sm:$0xff]
    %v260 = vld [vmem:[#allocation7 + $0x5b8] sm:$0xff]
    %v261 = vld [vmem:[#allocation7 + $0x5c0] sm:$0xff]
    %v262 = vld [vmem:[#allocation7 + $0x5c8] sm:$0xff]
    %v263 = vld [vmem:[#allocation7 + $0x5d0] sm:$0xff]
    %v264 = vld [vmem:[#allocation7 + $0x5d8] sm:$0xff]
    %v265 = vld [vmem:[#allocation7 + $0x5e0] sm:$0xff]
    %v266 = vld [vmem:[#allocation7 + $0x5e8] sm:$0xff]
    %v267 = vld [vmem:[#allocation7 + $0x5f0] sm:$0xff]
    %v268 = vld [vmem:[#allocation7 + $0x5f8] sm:$0xff]
    %v269 = vld [vmem:[#allocation7 + $0x600] sm:$0xff]
    %v270 = vld [vmem:[#allocation7 + $0x608] sm:$0xff]
    %v271 = vld [vmem:[#allocation7 + $0x610] sm:$0xff]
    %v272 = vld [vmem:[#allocation7 + $0x618] sm:$0xff]
    %v273 = vld [vmem:[#allocation7 + $0x620] sm:$0xff]
    %v274 = vld [vmem:[#allocation7 + $0x628] sm:$0xff]
    %v275 = vld [vmem:[#allocation7 + $0x630] sm:$0xff]
    %v276 = vld [vmem:[#allocation7 + $0x638] sm:$0xff]
    %v277 = vld [vmem:[#allocation7 + $0x640] sm:$0xff]
    %v278 = vld [vmem:[#allocation7 + $0x648] sm:$0xff]
    %v279 = vld [vmem:[#allocation7 + $0x650] sm:$0xff]
    %v280 = vld [vmem:[#allocation7 + $0x658] sm:$0xff]
    %v281 = vld [vmem:[#allocation7 + $0x660] sm:$0xff]
    %v282 = vld [vmem:[#allocation7 + $0x668] sm:$0xff]
    %v283 = vld [vmem:[#allocation7 + $0x670] sm:$0xff]
    %v284 = vld [vmem:[#allocation7 + $0x678] sm:$0xff]
    %s285 = scalar_lea.vmem [#allocation7], 1664
    %v286 = vld [vmem:[%s285] ss:$8 sm:$0xf]
    %v287 = vlaneseq
    %v288 = vand.u32 %v287, 127
    %v289 = vadd.s32 %v288, 128
    %v290 = vadd.s32 %v288, 256
    %v291 = vadd.s32 %v288, 384
    %v292 = vand.u32 %v288, 64
    %v293 = vand.u32 %v289, 64
    %v294 = vand.u32 %v290, 64
    %v295 = vand.u32 %v291, 64
    %vm296 = vcmp.eq.s32.totalorder %v292, 0
    %vm297 = vcmp.eq.s32.totalorder %v293, 0
    %vm298 = vcmp.eq.s32.totalorder %v294, 0
    %vm299 = vcmp.eq.s32.totalorder %v295, 0
    %v301 = vperm.slane %v156, 0
    %v302 = vperm.slane %v156, 1
    %v303 = vperm.slane %v156, 2
    %v304 = vperm.slane %v156, 3
    %vm309 = vcmask 195584
    %v311 = vsel %vm309, %v77, 0
    %313 = vmatpush.msra.mxu0 0.0
    %314 = vmatpush.msra.mxu0 0.0
    %315 = vmatpush.msra.mxu0 0.0
    %316 = vmatpush.msra.mxu0 0.0
    %317 = vmatpush.msra.mxu0 0.0
    %318 = vmatpush.msra.mxu0 0.0
    %319 = vmatpush.msra.mxu0 0.0
    %320 = vmatpush.msra.mxu0 0.0
    %321 = vmatpush.msra.mxu0 0.0
    %322 = vmatpush.msra.mxu0 0.0
    %323 = vmatpush.msra.mxu0 0.0
    %324 = vmatpush.msra.mxu0 0.0
    %325 = vmatpush.msra.mxu0 0.0
    %326 = vmatpush.msra.mxu0 %v87
    %327 = vmatpush.msra.mxu0 %v83
    %328 = vmatpush.msra.mxu0 %v79
    %329 = vmatmul.f32.gmra.mxu0 %v311
    %v330 = vpop.f32.mrf.mxu0
    %v331 = vadd.f32 %v301, %v330
    %332 = vdwg.mxu0
    %333 = vmatpush.msra.mxu0 0.0
    %334 = vmatpush.msra.mxu0 0.0
    %335 = vmatpush.msra.mxu0 0.0
    %336 = vmatpush.msra.mxu0 0.0
    %337 = vmatpush.msra.mxu0 0.0
    %338 = vmatpush.msra.mxu0 0.0
    %339 = vmatpush.msra.mxu0 0.0
    %340 = vmatpush.msra.mxu0 0.0
    %341 = vmatpush.msra.mxu0 0.0
    %342 = vmatpush.msra.mxu0 0.0
    %343 = vmatpush.msra.mxu0 0.0
    %344 = vmatpush.msra.mxu0 0.0
    %345 = vmatpush.msra.mxu0 0.0
    %346 = vmatpush.msra.mxu0 %v88
    %347 = vmatpush.msra.mxu0 %v84
    %348 = vmatpush.msra.mxu0 %v80
    %349 = vmatmul.f32.gmra.mxu0 %v311
    %v350 = vpop.f32.mrf.mxu0
    %v351 = vadd.f32 %v302, %v350
    %352 = vdwg.mxu0
    %353 = vmatpush.msra.mxu0 0.0
    %354 = vmatpush.msra.mxu0 0.0
    %355 = vmatpush.msra.mxu0 0.0
    %356 = vmatpush.msra.mxu0 0.0
    %357 = vmatpush.msra.mxu0 0.0
    %358 = vmatpush.msra.mxu0 0.0
    %359 = vmatpush.msra.mxu0 0.0
    %360 = vmatpush.msra.mxu0 0.0
    %361 = vmatpush.msra.mxu0 0.0
    %362 = vmatpush.msra.mxu0 0.0
    %363 = vmatpush.msra.mxu0 0.0
    %364 = vmatpush.msra.mxu0 0.0
    %365 = vmatpush.msra.mxu0 0.0
    %366 = vmatpush.msra.mxu0 %v89
    %367 = vmatpush.msra.mxu0 %v85
    %368 = vmatpush.msra.mxu0 %v81
    %369 = vmatmul.f32.gmra.mxu0 %v311
    %v370 = vpop.f32.mrf.mxu0
    %v371 = vadd.f32 %v303, %v370
    %372 = vdwg.mxu0
    %373 = vmatpush.msra.mxu0 0.0
    %374 = vmatpush.msra.mxu0 0.0
    %375 = vmatpush.msra.mxu0 0.0
    %376 = vmatpush.msra.mxu0 0.0
    %377 = vmatpush.msra.mxu0 0.0
    %378 = vmatpush.msra.mxu0 0.0
    %379 = vmatpush.msra.mxu0 0.0
    %380 = vmatpush.msra.mxu0 0.0
    %381 = vmatpush.msra.mxu0 0.0
    %382 = vmatpush.msra.mxu0 0.0
    %383 = vmatpush.msra.mxu0 0.0
    %384 = vmatpush.msra.mxu0 0.0
    %385 = vmatpush.msra.mxu0 0.0
    %386 = vmatpush.msra.mxu0 %v90
    %387 = vmatpush.msra.mxu0 %v86
    %388 = vmatpush.msra.mxu0 %v82
    %389 = vmatmul.f32.gmra.mxu0 %v311
    %v390 = vpop.f32.mrf.mxu0
    %v391 = vadd.f32 %v304, %v390
    %392 = vdwg.mxu0
    %v397 = vrot.slane %v331, 6
    %v398 = vrot.slane %v351, 6
    %v399 = vrot.slane %v371, 6
    %v400 = vrot.slane %v391, 6
    %v405 = vsel %vm296, %v331, %v397
    %v406 = vsel %vm297, %v351, %v398
    %v407 = vsel %vm298, %v371, %v399
    %v408 = vsel %vm299, %v391, %v400
    %409 = vmatpush.msra.mxu0 %v151
    %410 = vmatpush.msra.mxu0 %v147
    %411 = vmatpush.msra.mxu0 %v143
    %412 = vmatpush.msra.mxu0 %v139
    %413 = vmatpush.msra.mxu0 %v135
    %414 = vmatpush.msra.mxu0 %v131
    %415 = vmatpush.msra.mxu0 %v127
    %416 = vmatpush.msra.mxu0 %v123
    %417 = vmatpush.msra.mxu0 %v119
    %418 = vmatpush.msra.mxu0 %v115
    %419 = vmatpush.msra.mxu0 %v111
    %420 = vmatpush.msra.mxu0 %v107
    %421 = vmatpush.msra.mxu0 %v103
    %422 = vmatpush.msra.mxu0 %v99
    %423 = vmatpush.msra.mxu0 %v95
    %424 = vmatpush.msra.mxu0 %v91
    %425 = vmatmul.f32.gmra.mxu0 0.0
    %v426 = vpop.f32.mrf.mxu0
    %v427 = vadd.f32 0.0, %v426
    %428 = vdwg.mxu0
    %429 = vmatpush.msra.mxu0 %v152
    %430 = vmatpush.msra.mxu0 %v148
    %431 = vmatpush.msra.mxu0 %v144
    %432 = vmatpush.msra.mxu0 %v140
    %433 = vmatpush.msra.mxu0 %v136
    %434 = vmatpush.msra.mxu0 %v132
    %435 = vmatpush.msra.mxu0 %v128
    %436 = vmatpush.msra.mxu0 %v124
    %437 = vmatpush.msra.mxu0 %v120
    %438 = vmatpush.msra.mxu0 %v116
    %439 = vmatpush.msra.mxu0 %v112
    %440 = vmatpush.msra.mxu0 %v108
    %441 = vmatpush.msra.mxu0 %v104
    %442 = vmatpush.msra.mxu0 %v100
    %443 = vmatpush.msra.mxu0 %v96
    %444 = vmatpush.msra.mxu0 %v92
    %445 = vmatmul.f32.gmra.mxu0 0.0
    %v446 = vpop.f32.mrf.mxu0
    %v447 = vadd.f32 0.0, %v446
    %448 = vdwg.mxu0
    %449 = vmatpush.msra.mxu0 %v153
    %450 = vmatpush.msra.mxu0 %v149
    %451 = vmatpush.msra.mxu0 %v145
    %452 = vmatpush.msra.mxu0 %v141
    %453 = vmatpush.msra.mxu0 %v137
    %454 = vmatpush.msra.mxu0 %v133
    %455 = vmatpush.msra.mxu0 %v129
    %456 = vmatpush.msra.mxu0 %v125
    %457 = vmatpush.msra.mxu0 %v121
    %458 = vmatpush.msra.mxu0 %v117
    %459 = vmatpush.msra.mxu0 %v113
    %460 = vmatpush.msra.mxu0 %v109
    %461 = vmatpush.msra.mxu0 %v105
    %462 = vmatpush.msra.mxu0 %v101
    %463 = vmatpush.msra.mxu0 %v97
    %464 = vmatpush.msra.mxu0 %v93
    %465 = vmatmul.f32.gmra.mxu0 0.0
    %v466 = vpop.f32.mrf.mxu0
    %v467 = vadd.f32 0.0, %v466
    %468 = vdwg.mxu0
    %469 = vmatpush.msra.mxu0 %v154
    %470 = vmatpush.msra.mxu0 %v150
    %471 = vmatpush.msra.mxu0 %v146
    %472 = vmatpush.msra.mxu0 %v142
    %473 = vmatpush.msra.mxu0 %v138
    %474 = vmatpush.msra.mxu0 %v134
    %475 = vmatpush.msra.mxu0 %v130
    %476 = vmatpush.msra.mxu0 %v126
    %477 = vmatpush.msra.mxu0 %v122
    %478 = vmatpush.msra.mxu0 %v118
    %479 = vmatpush.msra.mxu0 %v114
    %480 = vmatpush.msra.mxu0 %v110
    %481 = vmatpush.msra.mxu0 %v106
    %482 = vmatpush.msra.mxu0 %v102
    %483 = vmatpush.msra.mxu0 %v98
    %484 = vmatpush.msra.mxu0 %v94
    %485 = vmatmul.f32.gmra.mxu0 0.0
    %v486 = vpop.f32.mrf.mxu0
    %v487 = vadd.f32 0.0, %v486
    %488 = vdwg.mxu0
    %v489 = vadd.f32 %v405, %v427
    %v490 = vadd.f32 %v406, %v447
    %v491 = vadd.f32 %v407, %v467
    %v492 = vadd.f32 %v408, %v487
    %v493 = vxor.u32 %v489, 2147483648
    %v494 = vmul.f32 %v493, 1.442695
    %v495 = vpow.pop %v494
    %v496 = vadd.f32 %v495, 1.0
    %v497 = vrcp.pop %v496
    %v498 = vmul.f32 %v496, %v497
    %v499 = vsub.f32 1.0, %v498
    %v500 = vmul.f32 %v497, %v499
    %v501 = vadd.f32 %v497, %v500
    %vm502 = vweird.f32 %v496
    %vm503 = vweird.f32 %v497
    %vm504 = vmor %vm502, %vm503
    %v505 = vsel %vm504, %v497, %v501
    %v506 = vand.u32 2147483647, %v496
    %vm507 = vcmp.eq.f32.partialorder %v506, 8.507059e+37
    %v508 = vand.u32 %v496, 2147483648
    %v509 = vor.u32 1.1754944e-38, %v508
    %v510 = vsel %vm507, %v509, %v505
    %v511 = vmul.f32 1.0, %v510
    %v512 = vxor.u32 %v490, 2147483648
    %v513 = vmul.f32 %v512, 1.442695
    %v514 = vpow.pop %v513
    %v515 = vadd.f32 %v514, 1.0
    %v516 = vrcp.pop %v515
    %v517 = vmul.f32 %v515, %v516
    %v518 = vsub.f32 1.0, %v517
    %v519 = vmul.f32 %v516, %v518
    %v520 = vadd.f32 %v516, %v519
    %vm521 = vweird.f32 %v515
    %vm522 = vweird.f32 %v516
    %vm523 = vmor %vm521, %vm522
    %v524 = vsel %vm523, %v516, %v520
    %v525 = vand.u32 2147483647, %v515
    %vm526 = vcmp.eq.f32.partialorder %v525, 8.507059e+37
    %v527 = vand.u32 %v515, 2147483648
    %v528 = vor.u32 1.1754944e-38, %v527
    %v529 = vsel %vm526, %v528, %v524
    %v530 = vmul.f32 1.0, %v529
    %v531 = vtanh.pop %v491
    %v532 = vxor.u32 %v492, 2147483648
    %v533 = vmul.f32 %v532, 1.442695
    %v534 = vpow.pop %v533
    %v535 = vadd.f32 %v534, 1.0
    %v536 = vrcp.pop %v535
    %v537 = vmul.f32 %v535, %v536
    %v538 = vsub.f32 1.0, %v537
    %v539 = vmul.f32 %v536, %v538
    %v540 = vadd.f32 %v536, %v539
    %vm541 = vweird.f32 %v535
    %vm542 = vweird.f32 %v536
    %vm543 = vmor %vm541, %vm542
    %v544 = vsel %vm543, %v536, %v540
    %v545 = vand.u32 2147483647, %v535
    %vm546 = vcmp.eq.f32.partialorder %v545, 8.507059e+37
    %v547 = vand.u32 %v535, 2147483648
    %v548 = vor.u32 1.1754944e-38, %v547
    %v549 = vsel %vm546, %v548, %v544
    %v550 = vmul.f32 1.0, %v549
    %v551 = vmul.f32 %v530, 0.0
    %v552 = vmul.f32 %v511, %v531
    %v553 = vadd.f32 %v551, %v552
    %v554 = vtanh.pop %v553
    %v555 = vmul.f32 %v550, %v554
    %v556 = vrot.slane %v331, 2
    %v557 = vrot.slane %v351, 2
    %v558 = vrot.slane %v371, 2
    %v559 = vrot.slane %v391, 2
    %v564 = vsel %vm296, %v331, %v556
    %v565 = vsel %vm297, %v351, %v557
    %v566 = vsel %vm298, %v371, %v558
    %v567 = vsel %vm299, %v391, %v559
    %568 = vmatpush.msra.mxu0 %v151
    %569 = vmatpush.msra.mxu0 %v147
    %570 = vmatpush.msra.mxu0 %v143
    %571 = vmatpush.msra.mxu0 %v139
    %572 = vmatpush.msra.mxu0 %v135
    %573 = vmatpush.msra.mxu0 %v131
    %574 = vmatpush.msra.mxu0 %v127
    %575 = vmatpush.msra.mxu0 %v123
    %576 = vmatpush.msra.mxu0 %v119
    %577 = vmatpush.msra.mxu0 %v115
    %578 = vmatpush.msra.mxu0 %v111
    %579 = vmatpush.msra.mxu0 %v107
    %580 = vmatpush.msra.mxu0 %v103
    %581 = vmatpush.msra.mxu0 %v99
    %582 = vmatpush.msra.mxu0 %v95
    %583 = vmatpush.msra.mxu0 %v91
    %584 = vmatmul.f32.gmra.mxu0 %v555
    %v585 = vpop.f32.mrf.mxu0
    %v586 = vadd.f32 0.0, %v585
    %587 = vdwg.mxu0
    %588 = vmatpush.msra.mxu0 %v152
    %589 = vmatpush.msra.mxu0 %v148
    %590 = vmatpush.msra.mxu0 %v144
    %591 = vmatpush.msra.mxu0 %v140
    %592 = vmatpush.msra.mxu0 %v136
    %593 = vmatpush.msra.mxu0 %v132
    %594 = vmatpush.msra.mxu0 %v128
    %595 = vmatpush.msra.mxu0 %v124
    %596 = vmatpush.msra.mxu0 %v120
    %597 = vmatpush.msra.mxu0 %v116
    %598 = vmatpush.msra.mxu0 %v112
    %599 = vmatpush.msra.mxu0 %v108
    %600 = vmatpush.msra.mxu0 %v104
    %601 = vmatpush.msra.mxu0 %v100
    %602 = vmatpush.msra.mxu0 %v96
    %603 = vmatpush.msra.mxu0 %v92
    %604 = vmatmul.f32.gmra.mxu0 %v555
    %v605 = vpop.f32.mrf.mxu0
    %v606 = vadd.f32 0.0, %v605
    %607 = vdwg.mxu0
    %608 = vmatpush.msra.mxu0 %v153
    %609 = vmatpush.msra.mxu0 %v149
    %610 = vmatpush.msra.mxu0 %v145
    %611 = vmatpush.msra.mxu0 %v141
    %612 = vmatpush.msra.mxu0 %v137
    %613 = vmatpush.msra.mxu0 %v133
    %614 = vmatpush.msra.mxu0 %v129
    %615 = vmatpush.msra.mxu0 %v125
    %616 = vmatpush.msra.mxu0 %v121
    %617 = vmatpush.msra.mxu0 %v117
    %618 = vmatpush.msra.mxu0 %v113
    %619 = vmatpush.msra.mxu0 %v109
    %620 = vmatpush.msra.mxu0 %v105
    %621 = vmatpush.msra.mxu0 %v101
    %622 = vmatpush.msra.mxu0 %v97
    %623 = vmatpush.msra.mxu0 %v93
    %624 = vmatmul.f32.gmra.mxu0 %v555
    %v625 = vpop.f32.mrf.mxu0
    %v626 = vadd.f32 0.0, %v625
    %627 = vdwg.mxu0
    %628 = vmatpush.msra.mxu0 %v154
    %629 = vmatpush.msra.mxu0 %v150
    %630 = vmatpush.msra.mxu0 %v146
    %631 = vmatpush.msra.mxu0 %v142
    %632 = vmatpush.msra.mxu0 %v138
    %633 = vmatpush.msra.mxu0 %v134
    %634 = vmatpush.msra.mxu0 %v130
    %635 = vmatpush.msra.mxu0 %v126
    %636 = vmatpush.msra.mxu0 %v122
    %637 = vmatpush.msra.mxu0 %v118
    %638 = vmatpush.msra.mxu0 %v114
    %639 = vmatpush.msra.mxu0 %v110
    %640 = vmatpush.msra.mxu0 %v106
    %641 = vmatpush.msra.mxu0 %v102
    %642 = vmatpush.msra.mxu0 %v98
    %643 = vmatpush.msra.mxu0 %v94
    %644 = vmatmul.f32.gmra.mxu0 %v555
    %v645 = vpop.f32.mrf.mxu0
    %v646 = vadd.f32 0.0, %v645
    %647 = vdwg.mxu0
    %v652 = vrot.slane %v586, 6
    %v653 = vrot.slane %v606, 6
    %v654 = vrot.slane %v626, 6
    %v655 = vrot.slane %v646, 6
    %v660 = vadd.f32 %v564, %v652
    %v661 = vadd.f32 %v565, %v653
    %v662 = vadd.f32 %v566, %v654
    %v663 = vadd.f32 %v567, %v655
    %v664 = vxor.u32 %v660, 2147483648
    %v665 = vmul.f32 %v664, 1.442695
    %v666 = vpow.pop %v665
    %v667 = vadd.f32 %v666, 1.0
    %v668 = vrcp.pop %v667
    %v669 = vmul.f32 %v667, %v668
    %v670 = vsub.f32 1.0, %v669
    %v671 = vmul.f32 %v668, %v670
    %v672 = vadd.f32 %v668, %v671
    %vm673 = vweird.f32 %v667
    %vm674 = vweird.f32 %v668
    %vm675 = vmor %vm673, %vm674
    %v676 = vsel %vm675, %v668, %v672
    %v677 = vand.u32 2147483647, %v667
    %vm678 = vcmp.eq.f32.partialorder %v677, 8.507059e+37
    %v679 = vand.u32 %v667, 2147483648
    %v680 = vor.u32 1.1754944e-38, %v679
    %v681 = vsel %vm678, %v680, %v676
    %v682 = vmul.f32 1.0, %v681
    %v683 = vxor.u32 %v661, 2147483648
    %v684 = vmul.f32 %v683, 1.442695
    %v685 = vpow.pop %v684
    %v686 = vadd.f32 %v685, 1.0
    %v687 = vrcp.pop %v686
    %v688 = vmul.f32 %v686, %v687
    %v689 = vsub.f32 1.0, %v688
    %v690 = vmul.f32 %v687, %v689
    %v691 = vadd.f32 %v687, %v690
    %vm692 = vweird.f32 %v686
    %vm693 = vweird.f32 %v687
    %vm694 = vmor %vm692, %vm693
    %v695 = vsel %vm694, %v687, %v691
    %v696 = vand.u32 2147483647, %v686
    %vm697 = vcmp.eq.f32.partialorder %v696, 8.507059e+37
    %v698 = vand.u32 %v686, 2147483648
    %v699 = vor.u32 1.1754944e-38, %v698
    %v700 = vsel %vm697, %v699, %v695
    %v701 = vmul.f32 1.0, %v700
    %v702 = vtanh.pop %v662
    %v703 = vxor.u32 %v663, 2147483648
    %v704 = vmul.f32 %v703, 1.442695
    %v705 = vpow.pop %v704
    %v706 = vadd.f32 %v705, 1.0
    %v707 = vrcp.pop %v706
    %v708 = vmul.f32 %v706, %v707
    %v709 = vsub.f32 1.0, %v708
    %v710 = vmul.f32 %v707, %v709
    %v711 = vadd.f32 %v707, %v710
    %vm712 = vweird.f32 %v706
    %vm713 = vweird.f32 %v707
    %vm714 = vmor %vm712, %vm713
    %v715 = vsel %vm714, %v707, %v711
    %v716 = vand.u32 2147483647, %v706
    %vm717 = vcmp.eq.f32.partialorder %v716, 8.507059e+37
    %v718 = vand.u32 %v706, 2147483648
    %v719 = vor.u32 1.1754944e-38, %v718
    %v720 = vsel %vm717, %v719, %v715
    %v721 = vmul.f32 1.0, %v720
    %v723 = vrot.slane %v553, 6
    %v725 = vmul.f32 %v701, %v723
    %v726 = vmul.f32 %v682, %v702
    %v727 = vadd.f32 %v725, %v726
    %v728 = vtanh.pop %v727
    %v729 = vmul.f32 %v721, %v728
    %v731 = vrot.slane %v729, 2
    %733 = vmatpush.msra.mxu0 %v151
    %734 = vmatpush.msra.mxu0 %v147
    %735 = vmatpush.msra.mxu0 %v143
    %736 = vmatpush.msra.mxu0 %v139
    %737 = vmatpush.msra.mxu0 %v135
    %738 = vmatpush.msra.mxu0 %v131
    %739 = vmatpush.msra.mxu0 %v127
    %740 = vmatpush.msra.mxu0 %v123
    %741 = vmatpush.msra.mxu0 %v119
    %742 = vmatpush.msra.mxu0 %v115
    %743 = vmatpush.msra.mxu0 %v111
    %744 = vmatpush.msra.mxu0 %v107
    %745 = vmatpush.msra.mxu0 %v103
    %746 = vmatpush.msra.mxu0 %v99
    %747 = vmatpush.msra.mxu0 %v95
    %748 = vmatpush.msra.mxu0 %v91
    %749 = vmatmul.f32.gmra.mxu0 %v731
    %v750 = vpop.f32.mrf.mxu0
    %v751 = vadd.f32 0.0, %v750
    %752 = vdwg.mxu0
    %753 = vmatpush.msra.mxu0 %v152
    %754 = vmatpush.msra.mxu0 %v148
    %755 = vmatpush.msra.mxu0 %v144
    %756 = vmatpush.msra.mxu0 %v140
    %757 = vmatpush.msra.mxu0 %v136
    %758 = vmatpush.msra.mxu0 %v132
    %759 = vmatpush.msra.mxu0 %v128
    %760 = vmatpush.msra.mxu0 %v124
    %761 = vmatpush.msra.mxu0 %v120
    %762 = vmatpush.msra.mxu0 %v116
    %763 = vmatpush.msra.mxu0 %v112
    %764 = vmatpush.msra.mxu0 %v108
    %765 = vmatpush.msra.mxu0 %v104
    %766 = vmatpush.msra.mxu0 %v100
    %767 = vmatpush.msra.mxu0 %v96
    %768 = vmatpush.msra.mxu0 %v92
    %769 = vmatmul.f32.gmra.mxu0 %v731
    %v770 = vpop.f32.mrf.mxu0
    %v771 = vadd.f32 0.0, %v770
    %772 = vdwg.mxu0
    %773 = vmatpush.msra.mxu0 %v153
    %774 = vmatpush.msra.mxu0 %v149
    %775 = vmatpush.msra.mxu0 %v145
    %776 = vmatpush.msra.mxu0 %v141
    %777 = vmatpush.msra.mxu0 %v137
    %778 = vmatpush.msra.mxu0 %v133
    %779 = vmatpush.msra.mxu0 %v129
    %780 = vmatpush.msra.mxu0 %v125
    %781 = vmatpush.msra.mxu0 %v121
    %782 = vmatpush.msra.mxu0 %v117
    %783 = vmatpush.msra.mxu0 %v113
    %784 = vmatpush.msra.mxu0 %v109
    %785 = vmatpush.msra.mxu0 %v105
    %786 = vmatpush.msra.mxu0 %v101
    %787 = vmatpush.msra.mxu0 %v97
    %788 = vmatpush.msra.mxu0 %v93
    %789 = vmatmul.f32.gmra.mxu0 %v731
    %v790 = vpop.f32.mrf.mxu0
    %v791 = vadd.f32 0.0, %v790
    %792 = vdwg.mxu0
    %793 = vmatpush.msra.mxu0 %v154
    %794 = vmatpush.msra.mxu0 %v150
    %795 = vmatpush.msra.mxu0 %v146
    %796 = vmatpush.msra.mxu0 %v142
    %797 = vmatpush.msra.mxu0 %v138
    %798 = vmatpush.msra.mxu0 %v134
    %799 = vmatpush.msra.mxu0 %v130
    %800 = vmatpush.msra.mxu0 %v126
    %801 = vmatpush.msra.mxu0 %v122
    %802 = vmatpush.msra.mxu0 %v118
    %803 = vmatpush.msra.mxu0 %v114
    %804 = vmatpush.msra.mxu0 %v110
    %805 = vmatpush.msra.mxu0 %v106
    %806 = vmatpush.msra.mxu0 %v102
    %807 = vmatpush.msra.mxu0 %v98
    %808 = vmatpush.msra.mxu0 %v94
    %809 = vmatmul.f32.gmra.mxu0 %v731
    %v810 = vpop.f32.mrf.mxu0
    %v811 = vadd.f32 0.0, %v810
    %812 = vdwg.mxu0
    %v817 = vrot.slane %v751, 4
    %v818 = vrot.slane %v771, 4
    %v819 = vrot.slane %v791, 4
    %v820 = vrot.slane %v811, 4
    %v825 = vadd.f32 %v405, %v817
    %v826 = vadd.f32 %v406, %v818
    %v827 = vadd.f32 %v407, %v819
    %v828 = vadd.f32 %v408, %v820
    %v829 = vxor.u32 %v825, 2147483648
    %v830 = vmul.f32 %v829, 1.442695
    %v831 = vpow.pop %v830
    %v832 = vadd.f32 %v831, 1.0
    %v833 = vrcp.pop %v832
    %v834 = vmul.f32 %v832, %v833
    %v835 = vsub.f32 1.0, %v834
    %v836 = vmul.f32 %v833, %v835
    %v837 = vadd.f32 %v833, %v836
    %vm838 = vweird.f32 %v832
    %vm839 = vweird.f32 %v833
    %vm840 = vmor %vm838, %vm839
    %v841 = vsel %vm840, %v833, %v837
    %v842 = vand.u32 2147483647, %v832
    %vm843 = vcmp.eq.f32.partialorder %v842, 8.507059e+37
    %v844 = vand.u32 %v832, 2147483648
    %v845 = vor.u32 1.1754944e-38, %v844
    %v846 = vsel %vm843, %v845, %v841
    %v847 = vmul.f32 1.0, %v846
    %v848 = vxor.u32 %v826, 2147483648
    %v849 = vmul.f32 %v848, 1.442695
    %v850 = vpow.pop %v849
    %v851 = vadd.f32 %v850, 1.0
    %v852 = vrcp.pop %v851
    %v853 = vmul.f32 %v851, %v852
    %v854 = vsub.f32 1.0, %v853
    %v855 = vmul.f32 %v852, %v854
    %v856 = vadd.f32 %v852, %v855
    %vm857 = vweird.f32 %v851
    %vm858 = vweird.f32 %v852
    %vm859 = vmor %vm857, %vm858
    %v860 = vsel %vm859, %v852, %v856
    %v861 = vand.u32 2147483647, %v851
    %vm862 = vcmp.eq.f32.partialorder %v861, 8.507059e+37
    %v863 = vand.u32 %v851, 2147483648
    %v864 = vor.u32 1.1754944e-38, %v863
    %v865 = vsel %vm862, %v864, %v860
    %v866 = vmul.f32 1.0, %v865
    %v867 = vtanh.pop %v827
    %v868 = vxor.u32 %v828, 2147483648
    %v869 = vmul.f32 %v868, 1.442695
    %v870 = vpow.pop %v869
    %v871 = vadd.f32 %v870, 1.0
    %v872 = vrcp.pop %v871
    %v873 = vmul.f32 %v871, %v872
    %v874 = vsub.f32 1.0, %v873
    %v875 = vmul.f32 %v872, %v874
    %v876 = vadd.f32 %v872, %v875
    %vm877 = vweird.f32 %v871
    %vm878 = vweird.f32 %v872
    %vm879 = vmor %vm877, %vm878
    %v880 = vsel %vm879, %v872, %v876
    %v881 = vand.u32 2147483647, %v871
    %vm882 = vcmp.eq.f32.partialorder %v881, 8.507059e+37
    %v883 = vand.u32 %v871, 2147483648
    %v884 = vor.u32 1.1754944e-38, %v883
    %v885 = vsel %vm882, %v884, %v880
    %v886 = vmul.f32 1.0, %v885
    %v888 = vrot.slane %v727, 6
    %v890 = vmul.f32 %v866, %v888
    %v891 = vmul.f32 %v847, %v867
    %v892 = vadd.f32 %v890, %v891
    %v893 = vtanh.pop %v892
    %v894 = vmul.f32 %v886, %v893
    %v896 = vrot.slane %v894, 4
    %898 = vmatpush.msra.mxu0 %v151
    %899 = vmatpush.msra.mxu0 %v147
    %900 = vmatpush.msra.mxu0 %v143
    %901 = vmatpush.msra.mxu0 %v139
    %902 = vmatpush.msra.mxu0 %v135
    %903 = vmatpush.msra.mxu0 %v131
    %904 = vmatpush.msra.mxu0 %v127
    %905 = vmatpush.msra.mxu0 %v123
    %906 = vmatpush.msra.mxu0 %v119
    %907 = vmatpush.msra.mxu0 %v115
    %908 = vmatpush.msra.mxu0 %v111
    %909 = vmatpush.msra.mxu0 %v107
    %910 = vmatpush.msra.mxu0 %v103
    %911 = vmatpush.msra.mxu0 %v99
    %912 = vmatpush.msra.mxu0 %v95
    %913 = vmatpush.msra.mxu0 %v91
    %914 = vmatmul.f32.gmra.mxu0 %v896
    %v915 = vpop.f32.mrf.mxu0
    %v916 = vadd.f32 0.0, %v915
    %917 = vdwg.mxu0
    %918 = vmatpush.msra.mxu0 %v152
    %919 = vmatpush.msra.mxu0 %v148
    %920 = vmatpush.msra.mxu0 %v144
    %921 = vmatpush.msra.mxu0 %v140
    %922 = vmatpush.msra.mxu0 %v136
    %923 = vmatpush.msra.mxu0 %v132
    %924 = vmatpush.msra.mxu0 %v128
    %925 = vmatpush.msra.mxu0 %v124
    %926 = vmatpush.msra.mxu0 %v120
    %927 = vmatpush.msra.mxu0 %v116
    %928 = vmatpush.msra.mxu0 %v112
    %929 = vmatpush.msra.mxu0 %v108
    %930 = vmatpush.msra.mxu0 %v104
    %931 = vmatpush.msra.mxu0 %v100
    %932 = vmatpush.msra.mxu0 %v96
    %933 = vmatpush.msra.mxu0 %v92
    %934 = vmatmul.f32.gmra.mxu0 %v896
    %v935 = vpop.f32.mrf.mxu0
    %v936 = vadd.f32 0.0, %v935
    %937 = vdwg.mxu0
    %938 = vmatpush.msra.mxu0 %v153
    %939 = vmatpush.msra.mxu0 %v149
    %940 = vmatpush.msra.mxu0 %v145
    %941 = vmatpush.msra.mxu0 %v141
    %942 = vmatpush.msra.mxu0 %v137
    %943 = vmatpush.msra.mxu0 %v133
    %944 = vmatpush.msra.mxu0 %v129
    %945 = vmatpush.msra.mxu0 %v125
    %946 = vmatpush.msra.mxu0 %v121
    %947 = vmatpush.msra.mxu0 %v117
    %948 = vmatpush.msra.mxu0 %v113
    %949 = vmatpush.msra.mxu0 %v109
    %950 = vmatpush.msra.mxu0 %v105
    %951 = vmatpush.msra.mxu0 %v101
    %952 = vmatpush.msra.mxu0 %v97
    %953 = vmatpush.msra.mxu0 %v93
    %954 = vmatmul.f32.gmra.mxu0 %v896
    %v955 = vpop.f32.mrf.mxu0
    %v956 = vadd.f32 0.0, %v955
    %957 = vdwg.mxu0
    %958 = vmatpush.msra.mxu0 %v154
    %959 = vmatpush.msra.mxu0 %v150
    %960 = vmatpush.msra.mxu0 %v146
    %961 = vmatpush.msra.mxu0 %v142
    %962 = vmatpush.msra.mxu0 %v138
    %963 = vmatpush.msra.mxu0 %v134
    %964 = vmatpush.msra.mxu0 %v130
    %965 = vmatpush.msra.mxu0 %v126
    %966 = vmatpush.msra.mxu0 %v122
    %967 = vmatpush.msra.mxu0 %v118
    %968 = vmatpush.msra.mxu0 %v114
    %969 = vmatpush.msra.mxu0 %v110
    %970 = vmatpush.msra.mxu0 %v106
    %971 = vmatpush.msra.mxu0 %v102
    %972 = vmatpush.msra.mxu0 %v98
    %973 = vmatpush.msra.mxu0 %v94
    %974 = vmatmul.f32.gmra.mxu0 %v896
    %v975 = vpop.f32.mrf.mxu0
    %v976 = vadd.f32 0.0, %v975
    %977 = vdwg.mxu0
    %v982 = vrot.slane %v916, 2
    %v983 = vrot.slane %v936, 2
    %v984 = vrot.slane %v956, 2
    %v985 = vrot.slane %v976, 2
    %v990 = vadd.f32 %v564, %v982
    %v991 = vadd.f32 %v565, %v983
    %v992 = vadd.f32 %v566, %v984
    %v993 = vadd.f32 %v567, %v985
    %v994 = vxor.u32 %v990, 2147483648
    %v995 = vmul.f32 %v994, 1.442695
    %v996 = vpow.pop %v995
    %v997 = vadd.f32 %v996, 1.0
    %v998 = vrcp.pop %v997
    %v999 = vmul.f32 %v997, %v998
    %v1000 = vsub.f32 1.0, %v999
    %v1001 = vmul.f32 %v998, %v1000
    %v1002 = vadd.f32 %v998, %v1001
    %vm1003 = vweird.f32 %v997
    %vm1004 = vweird.f32 %v998
    %vm1005 = vmor %vm1003, %vm1004
    %v1006 = vsel %vm1005, %v998, %v1002
    %v1007 = vand.u32 2147483647, %v997
    %vm1008 = vcmp.eq.f32.partialorder %v1007, 8.507059e+37
    %v1009 = vand.u32 %v997, 2147483648
    %v1010 = vor.u32 1.1754944e-38, %v1009
    %v1011 = vsel %vm1008, %v1010, %v1006
    %v1012 = vmul.f32 1.0, %v1011
    %v1013 = vxor.u32 %v991, 2147483648
    %v1014 = vmul.f32 %v1013, 1.442695
    %v1015 = vpow.pop %v1014
    %v1016 = vadd.f32 %v1015, 1.0
    %v1017 = vrcp.pop %v1016
    %v1018 = vmul.f32 %v1016, %v1017
    %v1019 = vsub.f32 1.0, %v1018
    %v1020 = vmul.f32 %v1017, %v1019
    %v1021 = vadd.f32 %v1017, %v1020
    %vm1022 = vweird.f32 %v1016
    %vm1023 = vweird.f32 %v1017
    %vm1024 = vmor %vm1022, %vm1023
    %v1025 = vsel %vm1024, %v1017, %v1021
    %v1026 = vand.u32 2147483647, %v1016
    %vm1027 = vcmp.eq.f32.partialorder %v1026, 8.507059e+37
    %v1028 = vand.u32 %v1016, 2147483648
    %v1029 = vor.u32 1.1754944e-38, %v1028
    %v1030 = vsel %vm1027, %v1029, %v1025
    %v1031 = vmul.f32 1.0, %v1030
    %v1032 = vtanh.pop %v992
    %v1033 = vxor.u32 %v993, 2147483648
    %v1034 = vmul.f32 %v1033, 1.442695
    %v1035 = vpow.pop %v1034
    %v1036 = vadd.f32 %v1035, 1.0
    %v1037 = vrcp.pop %v1036
    %v1038 = vmul.f32 %v1036, %v1037
    %v1039 = vsub.f32 1.0, %v1038
    %v1040 = vmul.f32 %v1037, %v1039
    %v1041 = vadd.f32 %v1037, %v1040
    %vm1042 = vweird.f32 %v1036
    %vm1043 = vweird.f32 %v1037
    %vm1044 = vmor %vm1042, %vm1043
    %v1045 = vsel %vm1044, %v1037, %v1041
    %v1046 = vand.u32 2147483647, %v1036
    %vm1047 = vcmp.eq.f32.partialorder %v1046, 8.507059e+37
    %v1048 = vand.u32 %v1036, 2147483648
    %v1049 = vor.u32 1.1754944e-38, %v1048
    %v1050 = vsel %vm1047, %v1049, %v1045
    %v1051 = vmul.f32 1.0, %v1050
    %v1053 = vrot.slane %v892, 6
    %v1055 = vmul.f32 %v1031, %v1053
    %v1056 = vmul.f32 %v1012, %v1032
    %v1057 = vadd.f32 %v1055, %v1056
    %v1058 = vtanh.pop %v1057
    %v1059 = vmul.f32 %v1051, %v1058
    %v1061 = vrot.slane %v1059, 6
    %v1063 = vsel %vm296, %v555, %v1061
    %v1064 = vrot.slane %v894, 2
    %v1066 = vsel %vm296, %v729, %v1064
    %v1067 = vrot.slane %v729, 6
    %v1069 = vsel %vm296, %v894, %v1067
    %v1071 = vrot.slane %v555, 2
    %v1073 = vsel %vm296, %v1059, %v1071
    %vm1074 = vcmask 1041408
    %v1075 = vsel %vm1074, %v1063, %v1066
    %vm1076 = vcmask 1043456
    %v1077 = vsel %vm1076, %v1075, %v1069
    %vm1078 = vcmask 1045504
    %v1079 = vsel %vm1078, %v1077, %v1073
    %v1081 = vperm.slane %v286, 0
    %v1082 = vperm.slane %v286, 1
    %v1083 = vperm.slane %v286, 2
    %v1084 = vperm.slane %v286, 3
    %1089 = vmatpush.msra.mxu0 %v217
    %1090 = vmatpush.msra.mxu0 %v213
    %1091 = vmatpush.msra.mxu0 %v209
    %1092 = vmatpush.msra.mxu0 %v205
    %1093 = vmatpush.msra.mxu0 %v201
    %1094 = vmatpush.msra.mxu0 %v197
    %1095 = vmatpush.msra.mxu0 %v193
    %1096 = vmatpush.msra.mxu0 %v189
    %1097 = vmatpush.msra.mxu0 %v185
    %1098 = vmatpush.msra.mxu0 %v181
    %1099 = vmatpush.msra.mxu0 %v177
    %1100 = vmatpush.msra.mxu0 %v173
    %1101 = vmatpush.msra.mxu0 %v169
    %1102 = vmatpush.msra.mxu0 %v165
    %1103 = vmatpush.msra.mxu0 %v161
    %1104 = vmatpush.msra.mxu0 %v157
    %1105 = vmatmul.f32.gmra.mxu0 %v1079
    %v1106 = vpop.f32.mrf.mxu0
    %v1107 = vadd.f32 %v1081, %v1106
    %1108 = vdwg.mxu0
    %1109 = vmatpush.msra.mxu0 %v218
    %1110 = vmatpush.msra.mxu0 %v214
    %1111 = vmatpush.msra.mxu0 %v210
    %1112 = vmatpush.msra.mxu0 %v206
    %1113 = vmatpush.msra.mxu0 %v202
    %1114 = vmatpush.msra.mxu0 %v198
    %1115 = vmatpush.msra.mxu0 %v194
    %1116 = vmatpush.msra.mxu0 %v190
    %1117 = vmatpush.msra.mxu0 %v186
    %1118 = vmatpush.msra.mxu0 %v182
    %1119 = vmatpush.msra.mxu0 %v178
    %1120 = vmatpush.msra.mxu0 %v174
    %1121 = vmatpush.msra.mxu0 %v170
    %1122 = vmatpush.msra.mxu0 %v166
    %1123 = vmatpush.msra.mxu0 %v162
    %1124 = vmatpush.msra.mxu0 %v158
    %1125 = vmatmul.f32.gmra.mxu0 %v1079
    %v1126 = vpop.f32.mrf.mxu0
    %v1127 = vadd.f32 %v1082, %v1126
    %1128 = vdwg.mxu0
    %1129 = vmatpush.msra.mxu0 %v219
    %1130 = vmatpush.msra.mxu0 %v215
    %1131 = vmatpush.msra.mxu0 %v211
    %1132 = vmatpush.msra.mxu0 %v207
    %1133 = vmatpush.msra.mxu0 %v203
    %1134 = vmatpush.msra.mxu0 %v199
    %1135 = vmatpush.msra.mxu0 %v195
    %1136 = vmatpush.msra.mxu0 %v191
    %1137 = vmatpush.msra.mxu0 %v187
    %1138 = vmatpush.msra.mxu0 %v183
    %1139 = vmatpush.msra.mxu0 %v179
    %1140 = vmatpush.msra.mxu0 %v175
    %1141 = vmatpush.msra.mxu0 %v171
    %1142 = vmatpush.msra.mxu0 %v167
    %1143 = vmatpush.msra.mxu0 %v163
    %1144 = vmatpush.msra.mxu0 %v159
    %1145 = vmatmul.f32.gmra.mxu0 %v1079
    %v1146 = vpop.f32.mrf.mxu0
    %v1147 = vadd.f32 %v1083, %v1146
    %1148 = vdwg.mxu0
    %1149 = vmatpush.msra.mxu0 %v220
    %1150 = vmatpush.msra.mxu0 %v216
    %1151 = vmatpush.msra.mxu0 %v212
    %1152 = vmatpush.msra.mxu0 %v208
    %1153 = vmatpush.msra.mxu0 %v204
    %1154 = vmatpush.msra.mxu0 %v200
    %1155 = vmatpush.msra.mxu0 %v196
    %1156 = vmatpush.msra.mxu0 %v192
    %1157 = vmatpush.msra.mxu0 %v188
    %1158 = vmatpush.msra.mxu0 %v184
    %1159 = vmatpush.msra.mxu0 %v180
    %1160 = vmatpush.msra.mxu0 %v176
    %1161 = vmatpush.msra.mxu0 %v172
    %1162 = vmatpush.msra.mxu0 %v168
    %1163 = vmatpush.msra.mxu0 %v164
    %1164 = vmatpush.msra.mxu0 %v160
    %1165 = vmatmul.f32.gmra.mxu0 %v1079
    %v1166 = vpop.f32.mrf.mxu0
    %v1167 = vadd.f32 %v1084, %v1166
    %1168 = vdwg.mxu0
    %v1173 = vrot.slane %v1107, 6
    %v1174 = vrot.slane %v1127, 6
    %v1175 = vrot.slane %v1147, 6
    %v1176 = vrot.slane %v1167, 6
    %v1181 = vsel %vm296, %v1107, %v1173
    %v1182 = vsel %vm297, %v1127, %v1174
    %v1183 = vsel %vm298, %v1147, %v1175
    %v1184 = vsel %vm299, %v1167, %v1176
    %1185 = vmatpush.msra.mxu0 %v281
    %1186 = vmatpush.msra.mxu0 %v277
    %1187 = vmatpush.msra.mxu0 %v273
    %1188 = vmatpush.msra.mxu0 %v269
    %1189 = vmatpush.msra.mxu0 %v265
    %1190 = vmatpush.msra.mxu0 %v261
    %1191 = vmatpush.msra.mxu0 %v257
    %1192 = vmatpush.msra.mxu0 %v253
    %1193 = vmatpush.msra.mxu0 %v249
    %1194 = vmatpush.msra.mxu0 %v245
    %1195 = vmatpush.msra.mxu0 %v241
    %1196 = vmatpush.msra.mxu0 %v237
    %1197 = vmatpush.msra.mxu0 %v233
    %1198 = vmatpush.msra.mxu0 %v229
    %1199 = vmatpush.msra.mxu0 %v225
    %1200 = vmatpush.msra.mxu0 %v221
    %1201 = vmatmul.f32.gmra.mxu0 0.0
    %v1202 = vpop.f32.mrf.mxu0
    %v1203 = vadd.f32 0.0, %v1202
    %1204 = vdwg.mxu0
    %1205 = vmatpush.msra.mxu0 %v282
    %1206 = vmatpush.msra.mxu0 %v278
    %1207 = vmatpush.msra.mxu0 %v274
    %1208 = vmatpush.msra.mxu0 %v270
    %1209 = vmatpush.msra.mxu0 %v266
    %1210 = vmatpush.msra.mxu0 %v262
    %1211 = vmatpush.msra.mxu0 %v258
    %1212 = vmatpush.msra.mxu0 %v254
    %1213 = vmatpush.msra.mxu0 %v250
    %1214 = vmatpush.msra.mxu0 %v246
    %1215 = vmatpush.msra.mxu0 %v242
    %1216 = vmatpush.msra.mxu0 %v238
    %1217 = vmatpush.msra.mxu0 %v234
    %1218 = vmatpush.msra.mxu0 %v230
    %1219 = vmatpush.msra.mxu0 %v226
    %1220 = vmatpush.msra.mxu0 %v222
    %1221 = vmatmul.f32.gmra.mxu0 0.0
    %v1222 = vpop.f32.mrf.mxu0
    %v1223 = vadd.f32 0.0, %v1222
    %1224 = vdwg.mxu0
    %1225 = vmatpush.msra.mxu0 %v283
    %1226 = vmatpush.msra.mxu0 %v279
    %1227 = vmatpush.msra.mxu0 %v275
    %1228 = vmatpush.msra.mxu0 %v271
    %1229 = vmatpush.msra.mxu0 %v267
    %1230 = vmatpush.msra.mxu0 %v263
    %1231 = vmatpush.msra.mxu0 %v259
    %1232 = vmatpush.msra.mxu0 %v255
    %1233 = vmatpush.msra.mxu0 %v251
    %1234 = vmatpush.msra.mxu0 %v247
    %1235 = vmatpush.msra.mxu0 %v243
    %1236 = vmatpush.msra.mxu0 %v239
    %1237 = vmatpush.msra.mxu0 %v235
    %1238 = vmatpush.msra.mxu0 %v231
    %1239 = vmatpush.msra.mxu0 %v227
    %1240 = vmatpush.msra.mxu0 %v223
    %1241 = vmatmul.f32.gmra.mxu0 0.0
    %v1242 = vpop.f32.mrf.mxu0
    %v1243 = vadd.f32 0.0, %v1242
    %1244 = vdwg.mxu0
    %1245 = vmatpush.msra.mxu0 %v284
    %1246 = vmatpush.msra.mxu0 %v280
    %1247 = vmatpush.msra.mxu0 %v276
    %1248 = vmatpush.msra.mxu0 %v272
    %1249 = vmatpush.msra.mxu0 %v268
    %1250 = vmatpush.msra.mxu0 %v264
    %1251 = vmatpush.msra.mxu0 %v260
    %1252 = vmatpush.msra.mxu0 %v256
    %1253 = vmatpush.msra.mxu0 %v252
    %1254 = vmatpush.msra.mxu0 %v248
    %1255 = vmatpush.msra.mxu0 %v244
    %1256 = vmatpush.msra.mxu0 %v240
    %1257 = vmatpush.msra.mxu0 %v236
    %1258 = vmatpush.msra.mxu0 %v232
    %1259 = vmatpush.msra.mxu0 %v228
    %1260 = vmatpush.msra.mxu0 %v224
    %1261 = vmatmul.f32.gmra.mxu0 0.0
    %v1262 = vpop.f32.mrf.mxu0
    %v1263 = vadd.f32 0.0, %v1262
    %1264 = vdwg.mxu0
    %v1265 = vadd.f32 %v1181, %v1203
    %v1266 = vadd.f32 %v1182, %v1223
    %v1267 = vadd.f32 %v1183, %v1243
    %v1268 = vadd.f32 %v1184, %v1263
    %v1269 = vxor.u32 %v1265, 2147483648
    %v1270 = vmul.f32 %v1269, 1.442695
    %v1271 = vpow.pop %v1270
    %v1272 = vadd.f32 %v1271, 1.0
    %v1273 = vrcp.pop %v1272
    %v1274 = vmul.f32 %v1272, %v1273
    %v1275 = vsub.f32 1.0, %v1274
    %v1276 = vmul.f32 %v1273, %v1275
    %v1277 = vadd.f32 %v1273, %v1276
    %vm1278 = vweird.f32 %v1272
    %vm1279 = vweird.f32 %v1273
    %vm1280 = vmor %vm1278, %vm1279
    %v1281 = vsel %vm1280, %v1273, %v1277
    %v1282 = vand.u32 2147483647, %v1272
    %vm1283 = vcmp.eq.f32.partialorder %v1282, 8.507059e+37
    %v1284 = vand.u32 %v1272, 2147483648
    %v1285 = vor.u32 1.1754944e-38, %v1284
    %v1286 = vsel %vm1283, %v1285, %v1281
    %v1287 = vmul.f32 1.0, %v1286
    %v1288 = vxor.u32 %v1266, 2147483648
    %v1289 = vmul.f32 %v1288, 1.442695
    %v1290 = vpow.pop %v1289
    %v1291 = vadd.f32 %v1290, 1.0
    %v1292 = vrcp.pop %v1291
    %v1293 = vmul.f32 %v1291, %v1292
    %v1294 = vsub.f32 1.0, %v1293
    %v1295 = vmul.f32 %v1292, %v1294
    %v1296 = vadd.f32 %v1292, %v1295
    %vm1297 = vweird.f32 %v1291
    %vm1298 = vweird.f32 %v1292
    %vm1299 = vmor %vm1297, %vm1298
    %v1300 = vsel %vm1299, %v1292, %v1296
    %v1301 = vand.u32 2147483647, %v1291
    %vm1302 = vcmp.eq.f32.partialorder %v1301, 8.507059e+37
    %v1303 = vand.u32 %v1291, 2147483648
    %v1304 = vor.u32 1.1754944e-38, %v1303
    %v1305 = vsel %vm1302, %v1304, %v1300
    %v1306 = vmul.f32 1.0, %v1305
    %v1307 = vtanh.pop %v1267
    %v1308 = vxor.u32 %v1268, 2147483648
    %v1309 = vmul.f32 %v1308, 1.442695
    %v1310 = vpow.pop %v1309
    %v1311 = vadd.f32 %v1310, 1.0
    %v1312 = vrcp.pop %v1311
    %v1313 = vmul.f32 %v1311, %v1312
    %v1314 = vsub.f32 1.0, %v1313
    %v1315 = vmul.f32 %v1312, %v1314
    %v1316 = vadd.f32 %v1312, %v1315
    %vm1317 = vweird.f32 %v1311
    %vm1318 = vweird.f32 %v1312
    %vm1319 = vmor %vm1317, %vm1318
    %v1320 = vsel %vm1319, %v1312, %v1316
    %v1321 = vand.u32 2147483647, %v1311
    %vm1322 = vcmp.eq.f32.partialorder %v1321, 8.507059e+37
    %v1323 = vand.u32 %v1311, 2147483648
    %v1324 = vor.u32 1.1754944e-38, %v1323
    %v1325 = vsel %vm1322, %v1324, %v1320
    %v1326 = vmul.f32 1.0, %v1325
    %v1327 = vmul.f32 %v1306, 0.0
    %v1328 = vmul.f32 %v1287, %v1307
    %v1329 = vadd.f32 %v1327, %v1328
    %v1330 = vtanh.pop %v1329
    %v1331 = vmul.f32 %v1326, %v1330
    %v1332 = vrot.slane %v1107, 2
    %v1333 = vrot.slane %v1127, 2
    %v1334 = vrot.slane %v1147, 2
    %v1335 = vrot.slane %v1167, 2
    %v1340 = vsel %vm296, %v1107, %v1332
    %v1341 = vsel %vm297, %v1127, %v1333
    %v1342 = vsel %vm298, %v1147, %v1334
    %v1343 = vsel %vm299, %v1167, %v1335
    %1344 = vmatpush.msra.mxu0 %v281
    %1345 = vmatpush.msra.mxu0 %v277
    %1346 = vmatpush.msra.mxu0 %v273
    %1347 = vmatpush.msra.mxu0 %v269
    %1348 = vmatpush.msra.mxu0 %v265
    %1349 = vmatpush.msra.mxu0 %v261
    %1350 = vmatpush.msra.mxu0 %v257
    %1351 = vmatpush.msra.mxu0 %v253
    %1352 = vmatpush.msra.mxu0 %v249
    %1353 = vmatpush.msra.mxu0 %v245
    %1354 = vmatpush.msra.mxu0 %v241
    %1355 = vmatpush.msra.mxu0 %v237
    %1356 = vmatpush.msra.mxu0 %v233
    %1357 = vmatpush.msra.mxu0 %v229
    %1358 = vmatpush.msra.mxu0 %v225
    %1359 = vmatpush.msra.mxu0 %v221
    %1360 = vmatmul.f32.gmra.mxu0 %v1331
    %v1361 = vpop.f32.mrf.mxu0
    %v1362 = vadd.f32 0.0, %v1361
    %1363 = vdwg.mxu0
    %1364 = vmatpush.msra.mxu0 %v282
    %1365 = vmatpush.msra.mxu0 %v278
    %1366 = vmatpush.msra.mxu0 %v274
    %1367 = vmatpush.msra.mxu0 %v270
    %1368 = vmatpush.msra.mxu0 %v266
    %1369 = vmatpush.msra.mxu0 %v262
    %1370 = vmatpush.msra.mxu0 %v258
    %1371 = vmatpush.msra.mxu0 %v254
    %1372 = vmatpush.msra.mxu0 %v250
    %1373 = vmatpush.msra.mxu0 %v246
    %1374 = vmatpush.msra.mxu0 %v242
    %1375 = vmatpush.msra.mxu0 %v238
    %1376 = vmatpush.msra.mxu0 %v234
    %1377 = vmatpush.msra.mxu0 %v230
    %1378 = vmatpush.msra.mxu0 %v226
    %1379 = vmatpush.msra.mxu0 %v222
    %1380 = vmatmul.f32.gmra.mxu0 %v1331
    %v1381 = vpop.f32.mrf.mxu0
    %v1382 = vadd.f32 0.0, %v1381
    %1383 = vdwg.mxu0
    %1384 = vmatpush.msra.mxu0 %v283
    %1385 = vmatpush.msra.mxu0 %v279
    %1386 = vmatpush.msra.mxu0 %v275
    %1387 = vmatpush.msra.mxu0 %v271
    %1388 = vmatpush.msra.mxu0 %v267
    %1389 = vmatpush.msra.mxu0 %v263
    %1390 = vmatpush.msra.mxu0 %v259
    %1391 = vmatpush.msra.mxu0 %v255
    %1392 = vmatpush.msra.mxu0 %v251
    %1393 = vmatpush.msra.mxu0 %v247
    %1394 = vmatpush.msra.mxu0 %v243
    %1395 = vmatpush.msra.mxu0 %v239
    %1396 = vmatpush.msra.mxu0 %v235
    %1397 = vmatpush.msra.mxu0 %v231
    %1398 = vmatpush.msra.mxu0 %v227
    %1399 = vmatpush.msra.mxu0 %v223
    %1400 = vmatmul.f32.gmra.mxu0 %v1331
    %v1401 = vpop.f32.mrf.mxu0
    %v1402 = vadd.f32 0.0, %v1401
    %1403 = vdwg.mxu0
    %1404 = vmatpush.msra.mxu0 %v284
    %1405 = vmatpush.msra.mxu0 %v280
    %1406 = vmatpush.msra.mxu0 %v276
    %1407 = vmatpush.msra.mxu0 %v272
    %1408 = vmatpush.msra.mxu0 %v268
    %1409 = vmatpush.msra.mxu0 %v264
    %1410 = vmatpush.msra.mxu0 %v260
    %1411 = vmatpush.msra.mxu0 %v256
    %1412 = vmatpush.msra.mxu0 %v252
    %1413 = vmatpush.msra.mxu0 %v248
    %1414 = vmatpush.msra.mxu0 %v244
    %1415 = vmatpush.msra.mxu0 %v240
    %1416 = vmatpush.msra.mxu0 %v236
    %1417 = vmatpush.msra.mxu0 %v232
    %1418 = vmatpush.msra.mxu0 %v228
    %1419 = vmatpush.msra.mxu0 %v224
    %1420 = vmatmul.f32.gmra.mxu0 %v1331
    %v1421 = vpop.f32.mrf.mxu0
    %v1422 = vadd.f32 0.0, %v1421
    %1423 = vdwg.mxu0
    %v1428 = vrot.slane %v1362, 6
    %v1429 = vrot.slane %v1382, 6
    %v1430 = vrot.slane %v1402, 6
    %v1431 = vrot.slane %v1422, 6
    %v1436 = vadd.f32 %v1340, %v1428
    %v1437 = vadd.f32 %v1341, %v1429
    %v1438 = vadd.f32 %v1342, %v1430
    %v1439 = vadd.f32 %v1343, %v1431
    %v1440 = vxor.u32 %v1436, 2147483648
    %v1441 = vmul.f32 %v1440, 1.442695
    %v1442 = vpow.pop %v1441
    %v1443 = vadd.f32 %v1442, 1.0
    %v1444 = vrcp.pop %v1443
    %v1445 = vmul.f32 %v1443, %v1444
    %v1446 = vsub.f32 1.0, %v1445
    %v1447 = vmul.f32 %v1444, %v1446
    %v1448 = vadd.f32 %v1444, %v1447
    %vm1449 = vweird.f32 %v1443
    %vm1450 = vweird.f32 %v1444
    %vm1451 = vmor %vm1449, %vm1450
    %v1452 = vsel %vm1451, %v1444, %v1448
    %v1453 = vand.u32 2147483647, %v1443
    %vm1454 = vcmp.eq.f32.partialorder %v1453, 8.507059e+37
    %v1455 = vand.u32 %v1443, 2147483648
    %v1456 = vor.u32 1.1754944e-38, %v1455
    %v1457 = vsel %vm1454, %v1456, %v1452
    %v1458 = vmul.f32 1.0, %v1457
    %v1459 = vxor.u32 %v1437, 2147483648
    %v1460 = vmul.f32 %v1459, 1.442695
    %v1461 = vpow.pop %v1460
    %v1462 = vadd.f32 %v1461, 1.0
    %v1463 = vrcp.pop %v1462
    %v1464 = vmul.f32 %v1462, %v1463
    %v1465 = vsub.f32 1.0, %v1464
    %v1466 = vmul.f32 %v1463, %v1465
    %v1467 = vadd.f32 %v1463, %v1466
    %vm1468 = vweird.f32 %v1462
    %vm1469 = vweird.f32 %v1463
    %vm1470 = vmor %vm1468, %vm1469
    %v1471 = vsel %vm1470, %v1463, %v1467
    %v1472 = vand.u32 2147483647, %v1462
    %vm1473 = vcmp.eq.f32.partialorder %v1472, 8.507059e+37
    %v1474 = vand.u32 %v1462, 2147483648
    %v1475 = vor.u32 1.1754944e-38, %v1474
    %v1476 = vsel %vm1473, %v1475, %v1471
    %v1477 = vmul.f32 1.0, %v1476
    %v1478 = vtanh.pop %v1438
    %v1479 = vxor.u32 %v1439, 2147483648
    %v1480 = vmul.f32 %v1479, 1.442695
    %v1481 = vpow.pop %v1480
    %v1482 = vadd.f32 %v1481, 1.0
    %v1483 = vrcp.pop %v1482
    %v1484 = vmul.f32 %v1482, %v1483
    %v1485 = vsub.f32 1.0, %v1484
    %v1486 = vmul.f32 %v1483, %v1485
    %v1487 = vadd.f32 %v1483, %v1486
    %vm1488 = vweird.f32 %v1482
    %vm1489 = vweird.f32 %v1483
    %vm1490 = vmor %vm1488, %vm1489
    %v1491 = vsel %vm1490, %v1483, %v1487
    %v1492 = vand.u32 2147483647, %v1482
    %vm1493 = vcmp.eq.f32.partialorder %v1492, 8.507059e+37
    %v1494 = vand.u32 %v1482, 2147483648
    %v1495 = vor.u32 1.1754944e-38, %v1494
    %v1496 = vsel %vm1493, %v1495, %v1491
    %v1497 = vmul.f32 1.0, %v1496
    %v1499 = vrot.slane %v1329, 6
    %v1501 = vmul.f32 %v1477, %v1499
    %v1502 = vmul.f32 %v1458, %v1478
    %v1503 = vadd.f32 %v1501, %v1502
    %v1504 = vtanh.pop %v1503
    %v1505 = vmul.f32 %v1497, %v1504
    %v1507 = vrot.slane %v1505, 2
    %1509 = vmatpush.msra.mxu0 %v281
    %1510 = vmatpush.msra.mxu0 %v277
    %1511 = vmatpush.msra.mxu0 %v273
    %1512 = vmatpush.msra.mxu0 %v269
    %1513 = vmatpush.msra.mxu0 %v265
    %1514 = vmatpush.msra.mxu0 %v261
    %1515 = vmatpush.msra.mxu0 %v257
    %1516 = vmatpush.msra.mxu0 %v253
    %1517 = vmatpush.msra.mxu0 %v249
    %1518 = vmatpush.msra.mxu0 %v245
    %1519 = vmatpush.msra.mxu0 %v241
    %1520 = vmatpush.msra.mxu0 %v237
    %1521 = vmatpush.msra.mxu0 %v233
    %1522 = vmatpush.msra.mxu0 %v229
    %1523 = vmatpush.msra.mxu0 %v225
    %1524 = vmatpush.msra.mxu0 %v221
    %1525 = vmatmul.f32.gmra.mxu0 %v1507
    %v1526 = vpop.f32.mrf.mxu0
    %v1527 = vadd.f32 0.0, %v1526
    %1528 = vdwg.mxu0
    %1529 = vmatpush.msra.mxu0 %v282
    %1530 = vmatpush.msra.mxu0 %v278
    %1531 = vmatpush.msra.mxu0 %v274
    %1532 = vmatpush.msra.mxu0 %v270
    %1533 = vmatpush.msra.mxu0 %v266
    %1534 = vmatpush.msra.mxu0 %v262
    %1535 = vmatpush.msra.mxu0 %v258
    %1536 = vmatpush.msra.mxu0 %v254
    %1537 = vmatpush.msra.mxu0 %v250
    %1538 = vmatpush.msra.mxu0 %v246
    %1539 = vmatpush.msra.mxu0 %v242
    %1540 = vmatpush.msra.mxu0 %v238
    %1541 = vmatpush.msra.mxu0 %v234
    %1542 = vmatpush.msra.mxu0 %v230
    %1543 = vmatpush.msra.mxu0 %v226
    %1544 = vmatpush.msra.mxu0 %v222
    %1545 = vmatmul.f32.gmra.mxu0 %v1507
    %v1546 = vpop.f32.mrf.mxu0
    %v1547 = vadd.f32 0.0, %v1546
    %1548 = vdwg.mxu0
    %1549 = vmatpush.msra.mxu0 %v283
    %1550 = vmatpush.msra.mxu0 %v279
    %1551 = vmatpush.msra.mxu0 %v275
    %1552 = vmatpush.msra.mxu0 %v271
    %1553 = vmatpush.msra.mxu0 %v267
    %1554 = vmatpush.msra.mxu0 %v263
    %1555 = vmatpush.msra.mxu0 %v259
    %1556 = vmatpush.msra.mxu0 %v255
    %1557 = vmatpush.msra.mxu0 %v251
    %1558 = vmatpush.msra.mxu0 %v247
    %1559 = vmatpush.msra.mxu0 %v243
    %1560 = vmatpush.msra.mxu0 %v239
    %1561 = vmatpush.msra.mxu0 %v235
    %1562 = vmatpush.msra.mxu0 %v231
    %1563 = vmatpush.msra.mxu0 %v227
    %1564 = vmatpush.msra.mxu0 %v223
    %1565 = vmatmul.f32.gmra.mxu0 %v1507
    %v1566 = vpop.f32.mrf.mxu0
    %v1567 = vadd.f32 0.0, %v1566
    %1568 = vdwg.mxu0
    %1569 = vmatpush.msra.mxu0 %v284
    %1570 = vmatpush.msra.mxu0 %v280
    %1571 = vmatpush.msra.mxu0 %v276
    %1572 = vmatpush.msra.mxu0 %v272
    %1573 = vmatpush.msra.mxu0 %v268
    %1574 = vmatpush.msra.mxu0 %v264
    %1575 = vmatpush.msra.mxu0 %v260
    %1576 = vmatpush.msra.mxu0 %v256
    %1577 = vmatpush.msra.mxu0 %v252
    %1578 = vmatpush.msra.mxu0 %v248
    %1579 = vmatpush.msra.mxu0 %v244
    %1580 = vmatpush.msra.mxu0 %v240
    %1581 = vmatpush.msra.mxu0 %v236
    %1582 = vmatpush.msra.mxu0 %v232
    %1583 = vmatpush.msra.mxu0 %v228
    %1584 = vmatpush.msra.mxu0 %v224
    %1585 = vmatmul.f32.gmra.mxu0 %v1507
    %v1586 = vpop.f32.mrf.mxu0
    %v1587 = vadd.f32 0.0, %v1586
    %1588 = vdwg.mxu0
    %v1593 = vrot.slane %v1527, 4
    %v1594 = vrot.slane %v1547, 4
    %v1595 = vrot.slane %v1567, 4
    %v1596 = vrot.slane %v1587, 4
    %v1601 = vadd.f32 %v1181, %v1593
    %v1602 = vadd.f32 %v1182, %v1594
    %v1603 = vadd.f32 %v1183, %v1595
    %v1604 = vadd.f32 %v1184, %v1596
    %v1605 = vxor.u32 %v1601, 2147483648
    %v1606 = vmul.f32 %v1605, 1.442695
    %v1607 = vpow.pop %v1606
    %v1608 = vadd.f32 %v1607, 1.0
    %v1609 = vrcp.pop %v1608
    %v1610 = vmul.f32 %v1608, %v1609
    %v1611 = vsub.f32 1.0, %v1610
    %v1612 = vmul.f32 %v1609, %v1611
    %v1613 = vadd.f32 %v1609, %v1612
    %vm1614 = vweird.f32 %v1608
    %vm1615 = vweird.f32 %v1609
    %vm1616 = vmor %vm1614, %vm1615
    %v1617 = vsel %vm1616, %v1609, %v1613
    %v1618 = vand.u32 2147483647, %v1608
    %vm1619 = vcmp.eq.f32.partialorder %v1618, 8.507059e+37
    %v1620 = vand.u32 %v1608, 2147483648
    %v1621 = vor.u32 1.1754944e-38, %v1620
    %v1622 = vsel %vm1619, %v1621, %v1617
    %v1623 = vmul.f32 1.0, %v1622
    %v1624 = vxor.u32 %v1602, 2147483648
    %v1625 = vmul.f32 %v1624, 1.442695
    %v1626 = vpow.pop %v1625
    %v1627 = vadd.f32 %v1626, 1.0
    %v1628 = vrcp.pop %v1627
    %v1629 = vmul.f32 %v1627, %v1628
    %v1630 = vsub.f32 1.0, %v1629
    %v1631 = vmul.f32 %v1628, %v1630
    %v1632 = vadd.f32 %v1628, %v1631
    %vm1633 = vweird.f32 %v1627
    %vm1634 = vweird.f32 %v1628
    %vm1635 = vmor %vm1633, %vm1634
    %v1636 = vsel %vm1635, %v1628, %v1632
    %v1637 = vand.u32 2147483647, %v1627
    %vm1638 = vcmp.eq.f32.partialorder %v1637, 8.507059e+37
    %v1639 = vand.u32 %v1627, 2147483648
    %v1640 = vor.u32 1.1754944e-38, %v1639
    %v1641 = vsel %vm1638, %v1640, %v1636
    %v1642 = vmul.f32 1.0, %v1641
    %v1643 = vtanh.pop %v1603
    %v1644 = vxor.u32 %v1604, 2147483648
    %v1645 = vmul.f32 %v1644, 1.442695
    %v1646 = vpow.pop %v1645
    %v1647 = vadd.f32 %v1646, 1.0
    %v1648 = vrcp.pop %v1647
    %v1649 = vmul.f32 %v1647, %v1648
    %v1650 = vsub.f32 1.0, %v1649
    %v1651 = vmul.f32 %v1648, %v1650
    %v1652 = vadd.f32 %v1648, %v1651
    %vm1653 = vweird.f32 %v1647
    %vm1654 = vweird.f32 %v1648
    %vm1655 = vmor %vm1653, %vm1654
    %v1656 = vsel %vm1655, %v1648, %v1652
    %v1657 = vand.u32 2147483647, %v1647
    %vm1658 = vcmp.eq.f32.partialorder %v1657, 8.507059e+37
    %v1659 = vand.u32 %v1647, 2147483648
    %v1660 = vor.u32 1.1754944e-38, %v1659
    %v1661 = vsel %vm1658, %v1660, %v1656
    %v1662 = vmul.f32 1.0, %v1661
    %v1664 = vrot.slane %v1503, 6
    %v1666 = vmul.f32 %v1642, %v1664
    %v1667 = vmul.f32 %v1623, %v1643
    %v1668 = vadd.f32 %v1666, %v1667
    %v1669 = vtanh.pop %v1668
    %v1670 = vmul.f32 %v1662, %v1669
    %v1672 = vrot.slane %v1670, 4
    %1674 = vmatpush.msra.mxu0 %v281
    %1675 = vmatpush.msra.mxu0 %v277
    %1676 = vmatpush.msra.mxu0 %v273
    %1677 = vmatpush.msra.mxu0 %v269
    %1678 = vmatpush.msra.mxu0 %v265
    %1679 = vmatpush.msra.mxu0 %v261
    %1680 = vmatpush.msra.mxu0 %v257
    %1681 = vmatpush.msra.mxu0 %v253
    %1682 = vmatpush.msra.mxu0 %v249
    %1683 = vmatpush.msra.mxu0 %v245
    %1684 = vmatpush.msra.mxu0 %v241
    %1685 = vmatpush.msra.mxu0 %v237
    %1686 = vmatpush.msra.mxu0 %v233
    %1687 = vmatpush.msra.mxu0 %v229
    %1688 = vmatpush.msra.mxu0 %v225
    %1689 = vmatpush.msra.mxu0 %v221
    %1690 = vmatmul.f32.gmra.mxu0 %v1672
    %v1691 = vpop.f32.mrf.mxu0
    %v1692 = vadd.f32 0.0, %v1691
    %1693 = vdwg.mxu0
    %1694 = vmatpush.msra.mxu0 %v282
    %1695 = vmatpush.msra.mxu0 %v278
    %1696 = vmatpush.msra.mxu0 %v274
    %1697 = vmatpush.msra.mxu0 %v270
    %1698 = vmatpush.msra.mxu0 %v266
    %1699 = vmatpush.msra.mxu0 %v262
    %1700 = vmatpush.msra.mxu0 %v258
    %1701 = vmatpush.msra.mxu0 %v254
    %1702 = vmatpush.msra.mxu0 %v250
    %1703 = vmatpush.msra.mxu0 %v246
    %1704 = vmatpush.msra.mxu0 %v242
    %1705 = vmatpush.msra.mxu0 %v238
    %1706 = vmatpush.msra.mxu0 %v234
    %1707 = vmatpush.msra.mxu0 %v230
    %1708 = vmatpush.msra.mxu0 %v226
    %1709 = vmatpush.msra.mxu0 %v222
    %1710 = vmatmul.f32.gmra.mxu0 %v1672
    %v1711 = vpop.f32.mrf.mxu0
    %v1712 = vadd.f32 0.0, %v1711
    %1713 = vdwg.mxu0
    %1714 = vmatpush.msra.mxu0 %v283
    %1715 = vmatpush.msra.mxu0 %v279
    %1716 = vmatpush.msra.mxu0 %v275
    %1717 = vmatpush.msra.mxu0 %v271
    %1718 = vmatpush.msra.mxu0 %v267
    %1719 = vmatpush.msra.mxu0 %v263
    %1720 = vmatpush.msra.mxu0 %v259
    %1721 = vmatpush.msra.mxu0 %v255
    %1722 = vmatpush.msra.mxu0 %v251
    %1723 = vmatpush.msra.mxu0 %v247
    %1724 = vmatpush.msra.mxu0 %v243
    %1725 = vmatpush.msra.mxu0 %v239
    %1726 = vmatpush.msra.mxu0 %v235
    %1727 = vmatpush.msra.mxu0 %v231
    %1728 = vmatpush.msra.mxu0 %v227
    %1729 = vmatpush.msra.mxu0 %v223
    %1730 = vmatmul.f32.gmra.mxu0 %v1672
    %v1731 = vpop.f32.mrf.mxu0
    %v1732 = vadd.f32 0.0, %v1731
    %1733 = vdwg.mxu0
    %1734 = vmatpush.msra.mxu0 %v284
    %1735 = vmatpush.msra.mxu0 %v280
    %1736 = vmatpush.msra.mxu0 %v276
    %1737 = vmatpush.msra.mxu0 %v272
    %1738 = vmatpush.msra.mxu0 %v268
    %1739 = vmatpush.msra.mxu0 %v264
    %1740 = vmatpush.msra.mxu0 %v260
    %1741 = vmatpush.msra.mxu0 %v256
    %1742 = vmatpush.msra.mxu0 %v252
    %1743 = vmatpush.msra.mxu0 %v248
    %1744 = vmatpush.msra.mxu0 %v244
    %1745 = vmatpush.msra.mxu0 %v240
    %1746 = vmatpush.msra.mxu0 %v236
    %1747 = vmatpush.msra.mxu0 %v232
    %1748 = vmatpush.msra.mxu0 %v228
    %1749 = vmatpush.msra.mxu0 %v224
    %1750 = vmatmul.f32.gmra.mxu0 %v1672
    %v1751 = vpop.f32.mrf.mxu0
    %v1752 = vadd.f32 0.0, %v1751
    %1753 = vdwg.mxu0
    %v1758 = vrot.slane %v1692, 2
    %v1759 = vrot.slane %v1712, 2
    %v1760 = vrot.slane %v1732, 2
    %v1761 = vrot.slane %v1752, 2
    %v1766 = vadd.f32 %v1340, %v1758
    %v1767 = vadd.f32 %v1341, %v1759
    %v1768 = vadd.f32 %v1342, %v1760
    %v1769 = vadd.f32 %v1343, %v1761
    %v1770 = vxor.u32 %v1766, 2147483648
    %v1771 = vmul.f32 %v1770, 1.442695
    %v1772 = vpow.pop %v1771
    %v1773 = vadd.f32 %v1772, 1.0
    %v1774 = vrcp.pop %v1773
    %v1775 = vmul.f32 %v1773, %v1774
    %v1776 = vsub.f32 1.0, %v1775
    %v1777 = vmul.f32 %v1774, %v1776
    %v1778 = vadd.f32 %v1774, %v1777
    %vm1779 = vweird.f32 %v1773
    %vm1780 = vweird.f32 %v1774
    %vm1781 = vmor %vm1779, %vm1780
    %v1782 = vsel %vm1781, %v1774, %v1778
    %v1783 = vand.u32 2147483647, %v1773
    %vm1784 = vcmp.eq.f32.partialorder %v1783, 8.507059e+37
    %v1785 = vand.u32 %v1773, 2147483648
    %v1786 = vor.u32 1.1754944e-38, %v1785
    %v1787 = vsel %vm1784, %v1786, %v1782
    %v1788 = vmul.f32 1.0, %v1787
    %v1789 = vxor.u32 %v1767, 2147483648
    %v1790 = vmul.f32 %v1789, 1.442695
    %v1791 = vpow.pop %v1790
    %v1792 = vadd.f32 %v1791, 1.0
    %v1793 = vrcp.pop %v1792
    %v1794 = vmul.f32 %v1792, %v1793
    %v1795 = vsub.f32 1.0, %v1794
    %v1796 = vmul.f32 %v1793, %v1795
    %v1797 = vadd.f32 %v1793, %v1796
    %vm1798 = vweird.f32 %v1792
    %vm1799 = vweird.f32 %v1793
    %vm1800 = vmor %vm1798, %vm1799
    %v1801 = vsel %vm1800, %v1793, %v1797
    %v1802 = vand.u32 2147483647, %v1792
    %vm1803 = vcmp.eq.f32.partialorder %v1802, 8.507059e+37
    %v1804 = vand.u32 %v1792, 2147483648
    %v1805 = vor.u32 1.1754944e-38, %v1804
    %v1806 = vsel %vm1803, %v1805, %v1801
    %v1807 = vmul.f32 1.0, %v1806
    %v1808 = vtanh.pop %v1768
    %v1809 = vxor.u32 %v1769, 2147483648
    %v1810 = vmul.f32 %v1809, 1.442695
    %v1811 = vpow.pop %v1810
    %v1812 = vadd.f32 %v1811, 1.0
    %v1813 = vrcp.pop %v1812
    %v1814 = vmul.f32 %v1812, %v1813
    %v1815 = vsub.f32 1.0, %v1814
    %v1816 = vmul.f32 %v1813, %v1815
    %v1817 = vadd.f32 %v1813, %v1816
    %vm1818 = vweird.f32 %v1812
    %vm1819 = vweird.f32 %v1813
    %vm1820 = vmor %vm1818, %vm1819
    %v1821 = vsel %vm1820, %v1813, %v1817
    %v1822 = vand.u32 2147483647, %v1812
    %vm1823 = vcmp.eq.f32.partialorder %v1822, 8.507059e+37
    %v1824 = vand.u32 %v1812, 2147483648
    %v1825 = vor.u32 1.1754944e-38, %v1824
    %v1826 = vsel %vm1823, %v1825, %v1821
    %v1827 = vmul.f32 1.0, %v1826
    %v1829 = vrot.slane %v1668, 6
    %v1831 = vmul.f32 %v1807, %v1829
    %v1832 = vmul.f32 %v1788, %v1808
    %v1833 = vadd.f32 %v1831, %v1832
    %v1834 = vtanh.pop %v1833
    %v1835 = vmul.f32 %v1827, %v1834
    %v1836 = vrot.slane %v1059, 1
    %1837 = vrot.lane.b32.xlu0 %v1836, 64
    %v1838 = vpop.permute.xlu0 %1837
    %1840 = vrot.lane.b32.xlu0 %v1059, 64
    %v1841 = vpop.permute.xlu0 %1840
    %vm1844 = vcmask 523264
    %v1845 = vsel %vm1844, %v1059, %v1838
    %v1846 = vsel %vm1844, %v1841, %v1836
    %v1848 = vrot.slane %v1835, 1
    %1849 = vrot.lane.b32.xlu0 %v1848, 64
    %v1850 = vpop.permute.xlu0 %1849
    %1852 = vrot.lane.b32.xlu0 %v1835, 64
    %v1853 = vpop.permute.xlu0 %1852
    %v1856 = vsel %vm1844, %v1835, %v1850
    %v1857 = vsel %vm1844, %v1853, %v1848
    %v1860 = vrot.slane %v1845, 6
    %v1861 = vrot.slane %v1846, 6
    %v1866 = vrot.slane %v1856, 5
    %v1867 = vrot.slane %v1857, 5
    %vm1870 = vcmask 1040384
    %v1871 = vsel %vm1870, %v1860, %v1866
    %v1872 = vsel %vm1870, %v1861, %v1867
    %v1873 = vld [vmem:[#allocation8] sm:$0xff]
    %v1874 = vld [vmem:[#allocation8 + $0x8] sm:$0xff]
    %v1875 = vld [vmem:[#allocation8 + $0x10] sm:$0xff]
    %v1876 = vld [vmem:[#allocation8 + $0x18] sm:$0xff]
    %v1877 = vld [vmem:[#allocation8 + $0x20] sm:$0xff]
    %v1878 = vld [vmem:[#allocation8 + $0x28] sm:$0xff]
    %v1879 = vld [vmem:[#allocation8 + $0x30] sm:$0xff]
    %v1880 = vld [vmem:[#allocation8 + $0x38] sm:$0xff]
    %v1881 = vld [vmem:[#allocation8 + $0x40] sm:$0xff]
    %v1882 = vld [vmem:[#allocation8 + $0x48] sm:$0xff]
    %v1883 = vld [vmem:[#allocation8 + $0x50] sm:$0xff]
    %v1884 = vld [vmem:[#allocation8 + $0x58] sm:$0xff]
    %v1885 = vld [vmem:[#allocation8 + $0x60] sm:$0xff]
    %v1886 = vld [vmem:[#allocation8 + $0x68] sm:$0xff]
    %v1887 = vld [vmem:[#allocation8 + $0x70] sm:$0xff]
    %v1888 = vld [vmem:[#allocation8 + $0x78] sm:$0xff]
    %v1889 = vld [vmem:[#allocation8 + $0x80] sm:$0xff]
    %v1890 = vld [vmem:[#allocation8 + $0x88] sm:$0xff]
    %v1891 = vld [vmem:[#allocation8 + $0x90] sm:$0xff]
    %v1892 = vld [vmem:[#allocation8 + $0x98] sm:$0xff]
    %v1893 = vld [vmem:[#allocation8 + $0xa0] sm:$0xff]
    %v1894 = vld [vmem:[#allocation8 + $0xa8] sm:$0xff]
    %v1895 = vld [vmem:[#allocation8 + $0xb0] sm:$0xff]
    %v1896 = vld [vmem:[#allocation8 + $0xb8] sm:$0xff]
    %v1897 = vld [vmem:[#allocation8 + $0xc0] sm:$0xff]
    %v1898 = vld [vmem:[#allocation8 + $0xc8] sm:$0xff]
    %v1899 = vld [vmem:[#allocation8 + $0xd0] sm:$0xff]
    %v1900 = vld [vmem:[#allocation8 + $0xd8] sm:$0xff]
    %v1901 = vld [vmem:[#allocation8 + $0xe0] sm:$0xff]
    %v1902 = vld [vmem:[#allocation8 + $0xe8] sm:$0xff]
    %v1903 = vld [vmem:[#allocation8 + $0xf0] sm:$0xff]
    %v1904 = vld [vmem:[#allocation8 + $0xf8] sm:$0xff]
    %v1905 = vld [vmem:[#allocation8 + $0x100] sm:$0xff]
    %v1906 = vld [vmem:[#allocation8 + $0x108] sm:$0xff]
    %v1907 = vld [vmem:[#allocation8 + $0x110] sm:$0xff]
    %v1908 = vld [vmem:[#allocation8 + $0x118] sm:$0xff]
    %v1909 = vld [vmem:[#allocation8 + $0x120] sm:$0xff]
    %v1910 = vld [vmem:[#allocation8 + $0x128] sm:$0xff]
    %v1911 = vld [vmem:[#allocation8 + $0x130] sm:$0xff]
    %v1912 = vld [vmem:[#allocation8 + $0x138] sm:$0xff]
    %v1913 = vld [vmem:[#allocation8 + $0x140] sm:$0xff]
    %v1914 = vld [vmem:[#allocation8 + $0x148] sm:$0xff]
    %v1915 = vld [vmem:[#allocation8 + $0x150] sm:$0xff]
    %v1916 = vld [vmem:[#allocation8 + $0x158] sm:$0xff]
    %v1917 = vld [vmem:[#allocation8 + $0x160] sm:$0xff]
    %v1918 = vld [vmem:[#allocation8 + $0x168] sm:$0xff]
    %v1919 = vld [vmem:[#allocation8 + $0x170] sm:$0xff]
    %v1920 = vld [vmem:[#allocation8 + $0x178] sm:$0xff]
    %v1921 = vld [vmem:[#allocation8 + $0x180] sm:$0xff]
    %v1922 = vld [vmem:[#allocation8 + $0x188] sm:$0xff]
    %v1923 = vld [vmem:[#allocation8 + $0x190] sm:$0xff]
    %v1924 = vld [vmem:[#allocation8 + $0x198] sm:$0xff]
    %v1925 = vld [vmem:[#allocation8 + $0x1a0] sm:$0xff]
    %v1926 = vld [vmem:[#allocation8 + $0x1a8] sm:$0xff]
    %v1927 = vld [vmem:[#allocation8 + $0x1b0] sm:$0xff]
    %v1928 = vld [vmem:[#allocation8 + $0x1b8] sm:$0xff]
    %v1929 = vld [vmem:[#allocation8 + $0x1c0] sm:$0xff]
    %v1930 = vld [vmem:[#allocation8 + $0x1c8] sm:$0xff]
    %v1931 = vld [vmem:[#allocation8 + $0x1d0] sm:$0xff]
    %v1932 = vld [vmem:[#allocation8 + $0x1d8] sm:$0xff]
    %v1933 = vld [vmem:[#allocation8 + $0x1e0] sm:$0xff]
    %v1934 = vld [vmem:[#allocation8 + $0x1e8] sm:$0xff]
    %v1935 = vld [vmem:[#allocation8 + $0x1f0] sm:$0xff]
    %v1936 = vld [vmem:[#allocation8 + $0x1f8] sm:$0xff]
    %v1937 = vld [vmem:[#allocation8 + $0x200] sm:$0xff]
    %v1938 = vld [vmem:[#allocation8 + $0x208] sm:$0xff]
    %v1939 = vld [vmem:[#allocation8 + $0x210] sm:$0xff]
    %v1940 = vld [vmem:[#allocation8 + $0x218] sm:$0xff]
    %s1941 = scalar_lea.vmem [#allocation8], 544
    %v1942 = vld [vmem:[%s1941] ss:$8 sm:$0x3]
    %vm1943 = vcmask 130048
    %v1945 = vsel %vm1943, %v78, 0
    %1947 = vmatpush.msra.mxu0 0.0
    %1948 = vmatpush.msra.mxu0 0.0
    %1949 = vmatpush.msra.mxu0 0.0
    %1950 = vmatpush.msra.mxu0 0.0
    %1951 = vmatpush.msra.mxu0 0.0
    %1952 = vmatpush.msra.mxu0 0.0
    %1953 = vmatpush.msra.mxu0 0.0
    %1954 = vmatpush.msra.mxu0 0.0
    %1955 = vmatpush.msra.mxu0 0.0
    %1956 = vmatpush.msra.mxu0 0.0
    %1957 = vmatpush.msra.mxu0 0.0
    %1958 = vmatpush.msra.mxu0 0.0
    %1959 = vmatpush.msra.mxu0 0.0
    %1960 = vmatpush.msra.mxu0 0.0
    %1961 = vmatpush.msra.mxu0 %v1939
    %1962 = vmatpush.msra.mxu0 %v1937
    %1963 = vmatmul.f32.gmra.mxu0 %v1945
    %v1964 = vpop.f32.mrf.mxu0
    %v1965 = vadd.f32 0.0, %v1964
    %1966 = vdwg.mxu0
    %1967 = vmatpush.msra.mxu0 0.0
    %1968 = vmatpush.msra.mxu0 0.0
    %1969 = vmatpush.msra.mxu0 0.0
    %1970 = vmatpush.msra.mxu0 0.0
    %1971 = vmatpush.msra.mxu0 0.0
    %1972 = vmatpush.msra.mxu0 0.0
    %1973 = vmatpush.msra.mxu0 0.0
    %1974 = vmatpush.msra.mxu0 0.0
    %1975 = vmatpush.msra.mxu0 0.0
    %1976 = vmatpush.msra.mxu0 0.0
    %1977 = vmatpush.msra.mxu0 0.0
    %1978 = vmatpush.msra.mxu0 0.0
    %1979 = vmatpush.msra.mxu0 0.0
    %1980 = vmatpush.msra.mxu0 0.0
    %1981 = vmatpush.msra.mxu0 %v1940
    %1982 = vmatpush.msra.mxu0 %v1938
    %1983 = vmatmul.f32.gmra.mxu0 %v1945
    %v1984 = vpop.f32.mrf.mxu0
    %v1985 = vadd.f32 0.0, %v1984
    %1986 = vdwg.mxu0
    %1987 = vmatpush.msra.mxu0 %v1903
    %1988 = vmatpush.msra.mxu0 %v1901
    %1989 = vmatpush.msra.mxu0 %v1899
    %1990 = vmatpush.msra.mxu0 %v1897
    %1991 = vmatpush.msra.mxu0 %v1895
    %1992 = vmatpush.msra.mxu0 %v1893
    %1993 = vmatpush.msra.mxu0 %v1891
    %1994 = vmatpush.msra.mxu0 %v1889
    %1995 = vmatpush.msra.mxu0 %v1887
    %1996 = vmatpush.msra.mxu0 %v1885
    %1997 = vmatpush.msra.mxu0 %v1883
    %1998 = vmatpush.msra.mxu0 %v1881
    %1999 = vmatpush.msra.mxu0 %v1879
    %2000 = vmatpush.msra.mxu0 %v1877
    %2001 = vmatpush.msra.mxu0 %v1875
    %2002 = vmatpush.msra.mxu0 %v1873
    %2003 = vmatmul.f32.gmra.mxu0 %v1871
    %v2004 = vpop.f32.mrf.mxu0
    %v2005 = vadd.f32 %v1965, %v2004
    %2006 = vdwg.mxu0
    %2007 = vmatpush.msra.mxu0 %v1935
    %2008 = vmatpush.msra.mxu0 %v1933
    %2009 = vmatpush.msra.mxu0 %v1931
    %2010 = vmatpush.msra.mxu0 %v1929
    %2011 = vmatpush.msra.mxu0 %v1927
    %2012 = vmatpush.msra.mxu0 %v1925
    %2013 = vmatpush.msra.mxu0 %v1923
    %2014 = vmatpush.msra.mxu0 %v1921
    %2015 = vmatpush.msra.mxu0 %v1919
    %2016 = vmatpush.msra.mxu0 %v1917
    %2017 = vmatpush.msra.mxu0 %v1915
    %2018 = vmatpush.msra.mxu0 %v1913
    %2019 = vmatpush.msra.mxu0 %v1911
    %2020 = vmatpush.msra.mxu0 %v1909
    %2021 = vmatpush.msra.mxu0 %v1907
    %2022 = vmatpush.msra.mxu0 %v1905
    %2023 = vmatmul.f32.gmra.mxu0 %v1872
    %v2024 = vpop.f32.mrf.mxu0
    %v2025 = vadd.f32 %v2005, %v2024
    %2026 = vdwg.mxu0
    %2027 = vmatpush.msra.mxu0 %v1904
    %2028 = vmatpush.msra.mxu0 %v1902
    %2029 = vmatpush.msra.mxu0 %v1900
    %2030 = vmatpush.msra.mxu0 %v1898
    %2031 = vmatpush.msra.mxu0 %v1896
    %2032 = vmatpush.msra.mxu0 %v1894
    %2033 = vmatpush.msra.mxu0 %v1892
    %2034 = vmatpush.msra.mxu0 %v1890
    %2035 = vmatpush.msra.mxu0 %v1888
    %2036 = vmatpush.msra.mxu0 %v1886
    %2037 = vmatpush.msra.mxu0 %v1884
    %2038 = vmatpush.msra.mxu0 %v1882
    %2039 = vmatpush.msra.mxu0 %v1880
    %2040 = vmatpush.msra.mxu0 %v1878
    %2041 = vmatpush.msra.mxu0 %v1876
    %2042 = vmatpush.msra.mxu0 %v1874
    %2043 = vmatmul.f32.gmra.mxu0 %v1871
    %v2044 = vpop.f32.mrf.mxu0
    %v2045 = vadd.f32 %v1985, %v2044
    %2046 = vdwg.mxu0
    %2047 = vmatpush.msra.mxu0 %v1936
    %2048 = vmatpush.msra.mxu0 %v1934
    %2049 = vmatpush.msra.mxu0 %v1932
    %2050 = vmatpush.msra.mxu0 %v1930
    %2051 = vmatpush.msra.mxu0 %v1928
    %2052 = vmatpush.msra.mxu0 %v1926
    %2053 = vmatpush.msra.mxu0 %v1924
    %2054 = vmatpush.msra.mxu0 %v1922
    %2055 = vmatpush.msra.mxu0 %v1920
    %2056 = vmatpush.msra.mxu0 %v1918
    %2057 = vmatpush.msra.mxu0 %v1916
    %2058 = vmatpush.msra.mxu0 %v1914
    %2059 = vmatpush.msra.mxu0 %v1912
    %2060 = vmatpush.msra.mxu0 %v1910
    %2061 = vmatpush.msra.mxu0 %v1908
    %2062 = vmatpush.msra.mxu0 %v1906
    %2063 = vmatmul.f32.gmra.mxu0 %v1872
    %v2064 = vpop.f32.mrf.mxu0
    %v2065 = vadd.f32 %v2045, %v2064
    %2066 = vdwg.mxu0
    %v2068 = vperm.slane %v1942, 0
    %v2069 = vperm.slane %v1942, 1
    %v2072 = vadd.f32 %v2025, %v2068
    %v2073 = vadd.f32 %v2065, %v2069
    %v2074 = vmax.f32 %v2072, 0.0
    %v2075 = vmax.f32 %v2073, 0.0
    %v2076 = vld [vmem:[#allocation8 + $0x230] sm:$0xff]
    %v2077 = vld [vmem:[#allocation8 + $0x238] sm:$0xff]
    %v2078 = vld [vmem:[#allocation8 + $0x240] sm:$0xff]
    %v2079 = vld [vmem:[#allocation8 + $0x248] sm:$0xff]
    %v2080 = vld [vmem:[#allocation8 + $0x250] sm:$0xff]
    %v2081 = vld [vmem:[#allocation8 + $0x258] sm:$0xff]
    %v2082 = vld [vmem:[#allocation8 + $0x260] sm:$0xff]
    %v2083 = vld [vmem:[#allocation8 + $0x268] sm:$0xff]
    %v2084 = vld [vmem:[#allocation8 + $0x270] sm:$0xff]
    %v2085 = vld [vmem:[#allocation8 + $0x278] sm:$0xff]
    %v2086 = vld [vmem:[#allocation8 + $0x280] sm:$0xff]
    %v2087 = vld [vmem:[#allocation8 + $0x288] sm:$0xff]
    %v2088 = vld [vmem:[#allocation8 + $0x290] sm:$0xff]
    %v2089 = vld [vmem:[#allocation8 + $0x298] sm:$0xff]
    %v2090 = vld [vmem:[#allocation8 + $0x2a0] sm:$0xff]
    %v2091 = vld [vmem:[#allocation8 + $0x2a8] sm:$0xff]
    %v2092 = vld [vmem:[#allocation8 + $0x2b0] sm:$0xff]
    %v2093 = vld [vmem:[#allocation8 + $0x2b8] sm:$0xff]
    %v2094 = vld [vmem:[#allocation8 + $0x2c0] sm:$0xff]
    %v2095 = vld [vmem:[#allocation8 + $0x2c8] sm:$0xff]
    %v2096 = vld [vmem:[#allocation8 + $0x2d0] sm:$0xff]
    %v2097 = vld [vmem:[#allocation8 + $0x2d8] sm:$0xff]
    %v2098 = vld [vmem:[#allocation8 + $0x2e0] sm:$0xff]
    %v2099 = vld [vmem:[#allocation8 + $0x2e8] sm:$0xff]
    %v2100 = vld [vmem:[#allocation8 + $0x2f0] sm:$0xff]
    %v2101 = vld [vmem:[#allocation8 + $0x2f8] sm:$0xff]
    %v2102 = vld [vmem:[#allocation8 + $0x300] sm:$0xff]
    %v2103 = vld [vmem:[#allocation8 + $0x308] sm:$0xff]
    %v2104 = vld [vmem:[#allocation8 + $0x310] sm:$0xff]
    %v2105 = vld [vmem:[#allocation8 + $0x318] sm:$0xff]
    %v2106 = vld [vmem:[#allocation8 + $0x320] sm:$0xff]
    %v2107 = vld [vmem:[#allocation8 + $0x328] sm:$0xff]
    %v2108 = vld [vmem:[#allocation8 + $0x330] sm:$0xff]
    %v2109 = vld [vmem:[#allocation8 + $0x338] sm:$0xff]
    %v2110 = vld [vmem:[#allocation8 + $0x340] sm:$0xff]
    %v2111 = vld [vmem:[#allocation8 + $0x348] sm:$0xff]
    %v2112 = vld [vmem:[#allocation8 + $0x350] sm:$0xff]
    %v2113 = vld [vmem:[#allocation8 + $0x358] sm:$0xff]
    %v2114 = vld [vmem:[#allocation8 + $0x360] sm:$0xff]
    %v2115 = vld [vmem:[#allocation8 + $0x368] sm:$0xff]
    %v2116 = vld [vmem:[#allocation8 + $0x370] sm:$0xff]
    %v2117 = vld [vmem:[#allocation8 + $0x378] sm:$0xff]
    %v2118 = vld [vmem:[#allocation8 + $0x380] sm:$0xff]
    %v2119 = vld [vmem:[#allocation8 + $0x388] sm:$0xff]
    %v2120 = vld [vmem:[#allocation8 + $0x390] sm:$0xff]
    %v2121 = vld [vmem:[#allocation8 + $0x398] sm:$0xff]
    %v2122 = vld [vmem:[#allocation8 + $0x3a0] sm:$0xff]
    %v2123 = vld [vmem:[#allocation8 + $0x3a8] sm:$0xff]
    %v2124 = vld [vmem:[#allocation8 + $0x3b0] sm:$0xff]
    %v2125 = vld [vmem:[#allocation8 + $0x3b8] sm:$0xff]
    %v2126 = vld [vmem:[#allocation8 + $0x3c0] sm:$0xff]
    %v2127 = vld [vmem:[#allocation8 + $0x3c8] sm:$0xff]
    %v2128 = vld [vmem:[#allocation8 + $0x3d0] sm:$0xff]
    %v2129 = vld [vmem:[#allocation8 + $0x3d8] sm:$0xff]
    %v2130 = vld [vmem:[#allocation8 + $0x3e0] sm:$0xff]
    %v2131 = vld [vmem:[#allocation8 + $0x3e8] sm:$0xff]
    %v2132 = vld [vmem:[#allocation8 + $0x3f0] sm:$0xff]
    %v2133 = vld [vmem:[#allocation8 + $0x3f8] sm:$0xff]
    %v2134 = vld [vmem:[#allocation8 + $0x400] sm:$0xff]
    %v2135 = vld [vmem:[#allocation8 + $0x408] sm:$0xff]
    %v2136 = vld [vmem:[#allocation8 + $0x410] sm:$0xff]
    %v2137 = vld [vmem:[#allocation8 + $0x418] sm:$0xff]
    %v2138 = vld [vmem:[#allocation8 + $0x420] sm:$0xff]
    %v2139 = vld [vmem:[#allocation8 + $0x428] sm:$0xff]
    %s2140 = scalar_lea.vmem [#allocation8], 1072
    %v2141 = vld [vmem:[%s2140] ss:$8 sm:$0x3]
    %v2143 = vperm.slane %v2141, 0
    %v2144 = vperm.slane %v2141, 1
    %2147 = vmatpush.msra.mxu0 %v2106
    %2148 = vmatpush.msra.mxu0 %v2104
    %2149 = vmatpush.msra.mxu0 %v2102
    %2150 = vmatpush.msra.mxu0 %v2100
    %2151 = vmatpush.msra.mxu0 %v2098
    %2152 = vmatpush.msra.mxu0 %v2096
    %2153 = vmatpush.msra.mxu0 %v2094
    %2154 = vmatpush.msra.mxu0 %v2092
    %2155 = vmatpush.msra.mxu0 %v2090
    %2156 = vmatpush.msra.mxu0 %v2088
    %2157 = vmatpush.msra.mxu0 %v2086
    %2158 = vmatpush.msra.mxu0 %v2084
    %2159 = vmatpush.msra.mxu0 %v2082
    %2160 = vmatpush.msra.mxu0 %v2080
    %2161 = vmatpush.msra.mxu0 %v2078
    %2162 = vmatpush.msra.mxu0 %v2076
    %2163 = vmatmul.f32.gmra.mxu0 %v2074
    %v2164 = vpop.f32.mrf.mxu0
    %v2165 = vadd.f32 %v2143, %v2164
    %2166 = vdwg.mxu0
    %2167 = vmatpush.msra.mxu0 %v2138
    %2168 = vmatpush.msra.mxu0 %v2136
    %2169 = vmatpush.msra.mxu0 %v2134
    %2170 = vmatpush.msra.mxu0 %v2132
    %2171 = vmatpush.msra.mxu0 %v2130
    %2172 = vmatpush.msra.mxu0 %v2128
    %2173 = vmatpush.msra.mxu0 %v2126
    %2174 = vmatpush.msra.mxu0 %v2124
    %2175 = vmatpush.msra.mxu0 %v2122
    %2176 = vmatpush.msra.mxu0 %v2120
    %2177 = vmatpush.msra.mxu0 %v2118
    %2178 = vmatpush.msra.mxu0 %v2116
    %2179 = vmatpush.msra.mxu0 %v2114
    %2180 = vmatpush.msra.mxu0 %v2112
    %2181 = vmatpush.msra.mxu0 %v2110
    %2182 = vmatpush.msra.mxu0 %v2108
    %2183 = vmatmul.f32.gmra.mxu0 %v2075
    %v2184 = vpop.f32.mrf.mxu0
    %v2185 = vadd.f32 %v2165, %v2184
    %2186 = vdwg.mxu0
    %2187 = vmatpush.msra.mxu0 %v2107
    %2188 = vmatpush.msra.mxu0 %v2105
    %2189 = vmatpush.msra.mxu0 %v2103
    %2190 = vmatpush.msra.mxu0 %v2101
    %2191 = vmatpush.msra.mxu0 %v2099
    %2192 = vmatpush.msra.mxu0 %v2097
    %2193 = vmatpush.msra.mxu0 %v2095
    %2194 = vmatpush.msra.mxu0 %v2093
    %2195 = vmatpush.msra.mxu0 %v2091
    %2196 = vmatpush.msra.mxu0 %v2089
    %2197 = vmatpush.msra.mxu0 %v2087
    %2198 = vmatpush.msra.mxu0 %v2085
    %2199 = vmatpush.msra.mxu0 %v2083
    %2200 = vmatpush.msra.mxu0 %v2081
    %2201 = vmatpush.msra.mxu0 %v2079
    %2202 = vmatpush.msra.mxu0 %v2077
    %2203 = vmatmul.f32.gmra.mxu0 %v2074
    %v2204 = vpop.f32.mrf.mxu0
    %v2205 = vadd.f32 %v2144, %v2204
    %2206 = vdwg.mxu0
    %2207 = vmatpush.msra.mxu0 %v2139
    %2208 = vmatpush.msra.mxu0 %v2137
    %2209 = vmatpush.msra.mxu0 %v2135
    %2210 = vmatpush.msra.mxu0 %v2133
    %2211 = vmatpush.msra.mxu0 %v2131
    %2212 = vmatpush.msra.mxu0 %v2129
    %2213 = vmatpush.msra.mxu0 %v2127
    %2214 = vmatpush.msra.mxu0 %v2125
    %2215 = vmatpush.msra.mxu0 %v2123
    %2216 = vmatpush.msra.mxu0 %v2121
    %2217 = vmatpush.msra.mxu0 %v2119
    %2218 = vmatpush.msra.mxu0 %v2117
    %2219 = vmatpush.msra.mxu0 %v2115
    %2220 = vmatpush.msra.mxu0 %v2113
    %2221 = vmatpush.msra.mxu0 %v2111
    %2222 = vmatpush.msra.mxu0 %v2109
    %2223 = vmatmul.f32.gmra.mxu0 %v2075
    %v2224 = vpop.f32.mrf.mxu0
    %v2225 = vadd.f32 %v2205, %v2224
    %2226 = vdwg.mxu0
    %v2229 = vrot.slane %v2225, 6
    %v2230 = vsel %vm1074, %v2185, %v2229
    %2232 = vst [vmem:[#allocation10] sm:$0xf] %v2230
    // Predicated region
    $region34: #{tpu_custom_call.1} parent=1 // pred_check
      _
    $region35: #{tpu_custom_call.1} parent=1 // pred_check_branch
      %2234 = sbr.rel (0) target = $region37
    $region36: #{tpu_custom_call.1} parent=1 // pred_region
      %2236 = vsyncadd [#allocation4], 0
      %s2238 = sshll.u32 [#allocation10], 4
      %s2239 = int_to_ptr.vmem [resolvable:$true] %s2238
      %s2240 = sshll.u32 %s4, 4
      %s2241 = int_to_ptr.hbm [resolvable:$true] %s2240
      %2243 = dma.vmem_to_hbm [thread:$0]  %s2239, 64, %s2241, [#allocation4]
    $region37: #{tpu_custom_call.1} parent=1 // pred_fallthru
      _
    // Predicated region
    $region38: #{tpu_custom_call.1} parent=1 // pred_check
      _
    $region39: #{tpu_custom_call.1} parent=1 // pred_check_branch
      %2245 = sbr.rel (0) target = $region41
    $region40: #{tpu_custom_call.1} parent=1 // pred_region
      %2247 = dma.done [#allocation4], 64
    $region41: #{tpu_custom_call.1} parent=1 // pred_fallthru
      _
    %2248 = vsyncpa [#allocation3], 1
    %2249 = vsyncpa [#allocation6], 1
    %2250 = vsyncpa [#allocation9], 1
    %2251 = vsyncpa [#allocation4], 1

</llo_original>
